<compile_context>
chip_gen: v6e
topology: v6e:2x2x1
jax: 0.10.0
libtpu: 0.0.40
codegen_flags: <defaults>
</compile_context>

<pallas_src>
import functools
import math

import jax
import jax.numpy as jnp
from jax.experimental import pallas as pl
from jax.experimental.pallas import tpu as pltpu


_TARGET_LANES = 1024           # packed output lane width target (multiple of 128)
_LANES_CAP = 4096              # don't pack if the minimal lane-dense width exceeds this
_TARGET_TILE_BYTES = 8 << 20   # ~8 MiB per-step output tile (HBM-write bound kernel)
_VMEM_LIMIT_BYTES = 32 << 20   # explicit scoped-VMEM limit (v5e default is only 16 MiB)
_XLA_FALLBACK_ELEMS = 1 << 18  # below this, fused XLA beats any pallas_call


def _kernel_simple(t_ref, w_ref, b_ref, o_ref):
    # t_ref: (TN, 1)   w_ref/b_ref: (1, C)   o_ref: (TN, C),  C % 128 == 0.
    # Broadcasted VPU multiply-add + EUP cos; stores are already lane-dense.
    o_ref[...] = jnp.cos(t_ref[...] * w_ref[...] + b_ref[...]).astype(o_ref.dtype)


def _kernel_packed(t_ref, s_ref, w_ref, b_ref, o_ref):
    # t_ref: (TN, k)   s_ref: (k, k*C) 0/1   w_ref/b_ref: (1, k*C)   o_ref: (TN, k*C)
    # Each packed output row holds k consecutive logical rows:
    #     out[n, j*C + c] = cos(t[n, j] * w[c] + b[c])
    # The lane replication t_exp[n, j*C + c] = t[n, j] runs on the otherwise
    # idle MXU via a 0/1 selection matrix; precision=HIGHEST keeps it exact in
    # f32 (t*1 accumulated with exact zeros), so results match the elementwise
    # reference bit-for-bit in practice.  This keeps VALU/XLU free for cos.
    t_exp = jnp.dot(t_ref[...], s_ref[...],
                    precision=jax.lax.Precision.HIGHEST,
                    preferred_element_type=jnp.float32)
    o_ref[...] = jnp.cos(t_exp * w_ref[...] + b_ref[...]).astype(o_ref.dtype)


def _pick_pack_factor(c: int) -> int:
    """Packing factor k: pack k logical rows into one (k*C)-lane output row.

    k*C is always a multiple of 128 (unmasked, lane-dense stores).  Returns 1
    when C is already lane-dense, or when the minimal lane-dense width would be
    unreasonably wide (large odd C -> the masked-store penalty is small anyway).
    """
    if c % 128 == 0:
        return 1
    k0 = 128 // math.gcd(c, 128)            # smallest k with k*C % 128 == 0
    if k0 * c > _LANES_CAP:
        return 1
    m = max(1, _TARGET_LANES // (k0 * c))    # widen toward the target lane width
    return k0 * m


def time_embedding(t: jax.Array, weight: jax.Array, bias: jax.Array, *,
                   out_dtype=jnp.float32,
                   force_pallas: bool = False,
                   target_tile_bytes: int = _TARGET_TILE_BYTES) -> jax.Array:
    """Pallas equivalent of TimeEmbedding.forward.

    t:      (..., 1) float
    weight: (C, 1)   float  (torch.nn.Linear layout: [out_features, in_features])
    bias:   (C,)     float
    returns (..., C) in `out_dtype` (float32 default; bfloat16 halves HBM writes).
    """
    assert t.shape[-1] == 1, "TimeEmbedding expects last dim == 1"
    C = int(weight.shape[0])
    lead = t.shape[:-1]
    N = 1
    for d in lead:
        N *= int(d)

    w_row = weight.reshape(1, C).astype(jnp.float32)   # w_row[0, c] = weight[c, 0]
    b_row = bias.reshape(1, C).astype(jnp.float32)

    # Small-problem dispatch: kernel launch + per-step overhead dominates tiny
    # shapes; a fused XLA elementwise is strictly faster there.
    if (N * C <= _XLA_FALLBACK_ELEMS) and not force_pallas:
        out = jnp.cos(t.astype(jnp.float32) * w_row[0] + b_row[0])
        return out.astype(out_dtype).reshape(*lead, C)

    tf = t.reshape(N).astype(jnp.float32)
    k = _pick_pack_factor(C)

    # Pad N up to a multiple of k (zero rows, computed then sliced away):
    # far cheaper than falling back to masked partial stores for C < 128.
    n_pad = (-N) % k
    if n_pad:
        tf = jnp.concatenate([tf, jnp.zeros((n_pad,), jnp.float32)])
    n_total = N + n_pad

    lanes = k * C
    n_rows = n_total // k
    out_itemsize = jnp.dtype(out_dtype).itemsize

    if k == 1:
        t2 = tf.reshape(n_rows, 1)
        operands = (t2, w_row, b_row)
        kernel = _kernel_simple
        extra_specs = []
    else:
        # (n_rows, k) is the same row-major buffer as (n_total, 1); w/b tiled k
        # times along lanes match the packed-lane layout [row0 ch*, row1 ch*, ...].
        t2 = tf.reshape(n_rows, k)
        sel = jnp.repeat(jnp.eye(k, dtype=jnp.float32), C, axis=1)   # (k, k*C)
        w2 = jnp.tile(w_row, (1, k))
        b2 = jnp.tile(b_row, (1, k))
        operands = (t2, sel, w2, b2)
        kernel = _kernel_packed
        extra_specs = [pl.BlockSpec((k, lanes), lambda i: (0, 0))]   # VMEM-resident S

    # Row-tile selection: target ~target_tile_bytes per output block, balanced
    # so the last grid block is not mostly padding.
    row_bytes = lanes * out_itemsize
    cap = max(8, (max(1, target_tile_bytes // row_bytes) // 8) * 8)
    if n_rows <= cap:
        tn = n_rows                                    # single full-extent block
    else:
        num_tiles = pl.cdiv(n_rows, cap)
        tn = ((pl.cdiv(n_rows, num_tiles) + 7) // 8) * 8
    grid = (pl.cdiv(n_rows, tn),)

    in_specs = ([pl.BlockSpec((tn, t2.shape[1]), lambda i: (i, 0))]
                + extra_specs
                + [pl.BlockSpec((1, lanes), lambda i: (0, 0)),     # VMEM-resident w
                   pl.BlockSpec((1, lanes), lambda i: (0, 0))])    # VMEM-resident b

    cost = pl.CostEstimate(
        flops=2 * n_rows * lanes * (k + 1),            # MXU expansion + mul/add
        transcendentals=n_rows * lanes,                # one cos per output element
        bytes_accessed=n_rows * lanes * out_itemsize + n_total * 4 + 2 * lanes * 4,
    )

    out2 = pl.pallas_call(
        kernel,
        out_shape=jax.ShapeDtypeStruct((n_rows, lanes), out_dtype),
        grid=grid,
        in_specs=in_specs,
        out_specs=pl.BlockSpec((tn, lanes), lambda i: (i, 0)),
        compiler_params=pltpu.CompilerParams(
            # Row tiles are independent: shard across TensorCores (megacore/v7x).
            dimension_semantics=("parallel",),
            vmem_limit_bytes=_VMEM_LIMIT_BYTES,
        ),
        cost_estimate=cost,
    )(*operands)

    # (n_rows, k*C) and (n_total, C) share the same row-major layout: the
    # reshape is free metadata; dropping the padded rows is a contiguous slice.
    out = out2.reshape(n_total, C)[:N]
    return out.reshape(*lead, C)


if __name__ == "__main__":
    master_key = jax.random.PRNGKey(0)

    def run_check(lead_shape, C, key, *, force_pallas=True,
                  target_tile_bytes=_TARGET_TILE_BYTES, out_dtype=jnp.float32):
        k_t, k_w, k_b = jax.random.split(key, 3)
        # torch.nn.Linear(1, C) default init: U(-1, 1) since fan_in == 1.
        weight = jax.random.uniform(k_w, (C, 1), jnp.float32, minval=-1.0, maxval=1.0)
        bias = jax.random.uniform(k_b, (C,), jnp.float32, minval=-1.0, maxval=1.0)
        t = jax.random.normal(k_t, (*lead_shape, 1), jnp.float32)

        fn = jax.jit(functools.partial(time_embedding,
                                       out_dtype=out_dtype,
                                       force_pallas=force_pallas,
                                       target_tile_bytes=target_tile_bytes))
        out = jax.block_until_ready(fn(t, weight, bias))

        # Pure-JAX elementwise reference (exact f32 math).
        ref = jnp.cos(t.astype(jnp.float32) * weight[:, 0] + bias)
        assert out.shape == (*lead_shape, C), (out.shape, lead_shape, C)
        max_err = float(jnp.max(jnp.abs(out.astype(jnp.float32) - ref)))
        tol = 1e-5 if out_dtype == jnp.float32 else 1e-2
        assert max_err <= tol, (lead_shape, C, max_err)
        return out

    keys = jax.random.split(master_key, 6)
    # Small demo shape from the module (batch=2, seq=8, embed_channels=32),
    # forced through the Pallas packed/MXU path (k=32, lanes=1024, padded N).
    run_check((2, 8), 32, keys[0], force_pallas=True)
    # Multi-tile grid (3 row tiles incl. a partial last block) via a reduced
    # per-step tile-byte target; exercises the pipelined parallel grid axis.
    run_check((4, 5120), 32, keys[1], force_pallas=True, target_tile_bytes=1 << 20)
    # C with a non-trivial pack factor (k=16, lanes=768).
    run_check((2, 8), 48, keys[2], force_pallas=True)
    # Lane-dense C (multiple of 128): k == 1 simple kernel, full-extent block.
    run_check((3, 40), 128, keys[3], force_pallas=True)
    # N not divisible by k: wrapper zero-pads rows and slices them back off.
    run_check((2, 7), 40, keys[4], force_pallas=True)
    # Small-problem dispatch (fused XLA path) for the tiny demo shape.
    run_check((2, 8), 32, keys[5], force_pallas=False)

    print("KERNEL_OK")
</pallas_src>

<mosaic_0001>
module attributes {stable_mosaic.version = 11 : i64} {
  func.func @_kernel_packed(%arg0: i32, %arg1: memref<1x32xf32, #tpu.memory_space<vmem>>, %arg2: memref<32x1024xf32, #tpu.memory_space<vmem>>, %arg3: memref<1x1024xf32, #tpu.memory_space<vmem>>, %arg4: memref<1x1024xf32, #tpu.memory_space<vmem>>, %arg5: memref<1x1024xf32, #tpu.memory_space<vmem>>) attributes {dimension_semantics = [#tpu.dimension_semantics<parallel>], iteration_bounds = array<i64: 1>, scalar_prefetch = 0 : i64, scratch_operands = 0 : i64, tpu.core_type = #tpu.core_type<tc>, window_params = [{transform_indices = @transform_0, window_bounds = array<i64: 1, 32>}, {pipeline_mode = #tpu.pipeline_mode<synchronous>, transform_indices = @transform_1, window_bounds = array<i64: 32, 1024>}, {pipeline_mode = #tpu.pipeline_mode<synchronous>, transform_indices = @transform_2, window_bounds = array<i64: 1, 1024>}, {pipeline_mode = #tpu.pipeline_mode<synchronous>, transform_indices = @transform_3, window_bounds = array<i64: 1, 1024>}, {transform_indices = @transform_4, window_bounds = array<i64: 1, 1024>}]} {
    %c0 = arith.constant 0 : index
    %c0_0 = arith.constant 0 : index
    %0 = vector.load %arg1[%c0, %c0_0] : memref<1x32xf32, #tpu.memory_space<vmem>>, vector<1x32xf32>
    %c0_1 = arith.constant 0 : index
    %c0_2 = arith.constant 0 : index
    %1 = vector.load %arg2[%c0_1, %c0_2] : memref<32x1024xf32, #tpu.memory_space<vmem>>, vector<32x1024xf32>
    %cst = arith.constant dense<0.000000e+00> : vector<1x1024xf32>
    %2 = tpu.matmul %0, %1, %cst {dimension_numbers = #tpu.dot_dimension_numbers<[1], [0], [0], [1], [0, 0, 1, 1], [], []>, precision = #tpu.contract_precision<fp32>} : vector<1x32xf32>, vector<32x1024xf32>, vector<1x1024xf32> -> vector<1x1024xf32>
    %c0_3 = arith.constant 0 : index
    %c0_4 = arith.constant 0 : index
    %3 = vector.load %arg3[%c0_3, %c0_4] : memref<1x1024xf32, #tpu.memory_space<vmem>>, vector<1x1024xf32>
    %4 = arith.mulf %2, %3 : vector<1x1024xf32>
    %c0_5 = arith.constant 0 : index
    %c0_6 = arith.constant 0 : index
    %5 = vector.load %arg4[%c0_5, %c0_6] : memref<1x1024xf32, #tpu.memory_space<vmem>>, vector<1x1024xf32>
    %6 = arith.addf %4, %5 : vector<1x1024xf32>
    %7 = math.cos %6 : vector<1x1024xf32>
    %c0_7 = arith.constant 0 : index
    %c0_8 = arith.constant 0 : index
    %8 = vector.load %arg5[%c0_7, %c0_8] : memref<1x1024xf32, #tpu.memory_space<vmem>>, vector<1x1024xf32>
    tpu.vector_store %arg5[%c0_7, %c0_8], %7 {strides = array<i32>} : memref<1x1024xf32, #tpu.memory_space<vmem>>, vector<1x1024xf32>,
    return
  }
  func.func @transform_0(%arg0: i32) -> (i32, i32) {
    %c0_i32 = arith.constant 0 : i32
    %c0_i32_0 = arith.constant 0 : i32
    return %arg0, %c0_i32 : i32, i32
  }
  func.func @transform_1(%arg0: i32) -> (i32, i32) {
    %c0_i32 = arith.constant 0 : i32
    %c0_i32_0 = arith.constant 0 : i32
    %c0_i32_1 = arith.constant 0 : i32
    return %c0_i32, %c0_i32_0 : i32, i32
  }
  func.func @transform_2(%arg0: i32) -> (i32, i32) {
    %c0_i32 = arith.constant 0 : i32
    %c0_i32_0 = arith.constant 0 : i32
    %c0_i32_1 = arith.constant 0 : i32
    return %c0_i32, %c0_i32_0 : i32, i32
  }
  func.func @transform_3(%arg0: i32) -> (i32, i32) {
    %c0_i32 = arith.constant 0 : i32
    %c0_i32_0 = arith.constant 0 : i32
    %c0_i32_1 = arith.constant 0 : i32
    return %c0_i32, %c0_i32_0 : i32, i32
  }
  func.func @transform_4(%arg0: i32) -> (i32, i32) {
    %c0_i32 = arith.constant 0 : i32
    %c0_i32_0 = arith.constant 0 : i32
    return %arg0, %c0_i32 : i32, i32
  }
}

</mosaic_0001>

<llo_original>
// kernel: time_embedding.1
$region0: #{time_embedding.1}
  #allocation0 [shape = 'u32[]', space=smem, size = 0x4, offset = 0x4, fixed_abs, tag = 'smem constant byte address 0x4 - core index']
  #allocation1 [shape = 'u32[144,128]{1,0:T(1,128)}', space=vmem, size = 0x12000, scoped, tag = 'internal scratch']
  %s0 = inlined_call_operand.vmem [shape: f32[1,32], index: 0, kind: input, shape index: {}]
  %s1 = inlined_call_operand.vmem [shape: f32[32,1024], index: 1, kind: input, shape index: {}]
  %s2 = inlined_call_operand.vmem [shape: f32[1,1024], index: 2, kind: input, shape index: {}]
  %s3 = inlined_call_operand.vmem [shape: f32[1,1024], index: 3, kind: input, shape index: {}]
  %s4 = inlined_call_operand.vmem [shape: f32[1,1024], index: 4, kind: output, shape index: {}]
  %s5 = sld [smem:[#allocation0]]
  $region26: #{time_embedding.1} parent=0
    _
  %s7 = ssub.s32 1, %s5
  %s8 = scalar_select 0, %s7, %s5
  // Predicated region
  $region2: #{time_embedding.1} parent=0 // pred_check
    _
  $region3: #{time_embedding.1} parent=0 // pred_check_branch
    %10 = sbr.rel (0) target = $region5
  $region4: #{time_embedding.1} parent=0 // pred_region
    _
  $region5: #{time_embedding.1} parent=0 // pred_fallthru
    _
  // Predicated region
  $region6: #{time_embedding.1} parent=0 // pred_check
    _
  $region7: #{time_embedding.1} parent=0 // pred_check_branch
    %12 = sbr.rel (0) target = $region9
  $region8: #{time_embedding.1} parent=0 // pred_region
    _
  $region9: #{time_embedding.1} parent=0 // pred_fallthru
    _
  // Predicated region
  $region10: #{time_embedding.1} parent=0 // pred_check
    _
  $region11: #{time_embedding.1} parent=0 // pred_check_branch
    %14 = sbr.rel (0) target = $region13
  $region12: #{time_embedding.1} parent=0 // pred_region
    _
  $region13: #{time_embedding.1} parent=0 // pred_fallthru
    _
  // Predicated region
  $region14: #{time_embedding.1} parent=0 // pred_check
    _
  $region15: #{time_embedding.1} parent=0 // pred_check_branch
    %16 = sbr.rel (0) target = $region17
  $region16: #{time_embedding.1} parent=0 // pred_region
    _
  $region17: #{time_embedding.1} parent=0 // pred_fallthru
    _
  %v17 = vld [vmem:[%s0] sm:$0x1]
  %v18 = vld [vmem:[%s1] sm:$0xff]
  %v19 = vld [vmem:[%s1 + $0x8] sm:$0xff]
  %v20 = vld [vmem:[%s1 + $0x10] sm:$0xff]
  %v21 = vld [vmem:[%s1 + $0x18] sm:$0xff]
  %v22 = vld [vmem:[%s1 + $0x20] sm:$0xff]
  %v23 = vld [vmem:[%s1 + $0x28] sm:$0xff]
  %v24 = vld [vmem:[%s1 + $0x30] sm:$0xff]
  %v25 = vld [vmem:[%s1 + $0x38] sm:$0xff]
  %v26 = vld [vmem:[%s1 + $0x40] sm:$0xff]
  %v27 = vld [vmem:[%s1 + $0x48] sm:$0xff]
  %v28 = vld [vmem:[%s1 + $0x50] sm:$0xff]
  %v29 = vld [vmem:[%s1 + $0x58] sm:$0xff]
  %v30 = vld [vmem:[%s1 + $0x60] sm:$0xff]
  %v31 = vld [vmem:[%s1 + $0x68] sm:$0xff]
  %v32 = vld [vmem:[%s1 + $0x70] sm:$0xff]
  %v33 = vld [vmem:[%s1 + $0x78] sm:$0xff]
  %v34 = vld [vmem:[%s1 + $0x80] sm:$0xff]
  %v35 = vld [vmem:[%s1 + $0x88] sm:$0xff]
  %v36 = vld [vmem:[%s1 + $0x90] sm:$0xff]
  %v37 = vld [vmem:[%s1 + $0x98] sm:$0xff]
  %v38 = vld [vmem:[%s1 + $0xa0] sm:$0xff]
  %v39 = vld [vmem:[%s1 + $0xa8] sm:$0xff]
  %v40 = vld [vmem:[%s1 + $0xb0] sm:$0xff]
  %v41 = vld [vmem:[%s1 + $0xb8] sm:$0xff]
  %v42 = vld [vmem:[%s1 + $0xc0] sm:$0xff]
  %v43 = vld [vmem:[%s1 + $0xc8] sm:$0xff]
  %v44 = vld [vmem:[%s1 + $0xd0] sm:$0xff]
  %v45 = vld [vmem:[%s1 + $0xd8] sm:$0xff]
  %v46 = vld [vmem:[%s1 + $0xe0] sm:$0xff]
  %v47 = vld [vmem:[%s1 + $0xe8] sm:$0xff]
  %v48 = vld [vmem:[%s1 + $0xf0] sm:$0xff]
  %v49 = vld [vmem:[%s1 + $0xf8] sm:$0xff]
  %vm50 = vcmask 261120
  %v52 = vsel %vm50, %v17, 0
  %54 = vmatprep.subr.mxu0 0.0
  %55 = vmatpush1.msra.mxu0 0.0
  %56 = vmatprep.subr.mxu0 0.0
  %57 = vmatpush1.msra.mxu0 0.0
  %58 = vmatprep.subr.mxu0 0.0
  %59 = vmatpush1.msra.mxu0 0.0
  %60 = vmatprep.subr.mxu0 0.0
  %61 = vmatpush1.msra.mxu0 0.0
  %62 = vmatprep.subr.mxu0 0.0
  %63 = vmatpush1.msra.mxu0 0.0
  %64 = vmatprep.subr.mxu0 0.0
  %65 = vmatpush1.msra.mxu0 0.0
  %66 = vmatprep.subr.mxu0 0.0
  %67 = vmatpush1.msra.mxu0 0.0
  %68 = vmatprep.subr.mxu0 0.0
  %69 = vmatpush1.msra.mxu0 0.0
  %70 = vmatprep.subr.mxu0 0.0
  %71 = vmatpush1.msra.mxu0 0.0
  %72 = vmatprep.subr.mxu0 0.0
  %73 = vmatpush1.msra.mxu0 0.0
  %74 = vmatprep.subr.mxu0 0.0
  %75 = vmatpush1.msra.mxu0 0.0
  %76 = vmatprep.subr.mxu0 0.0
  %77 = vmatpush1.msra.mxu0 0.0
  %v78 = vand.u32 %v43, 4294901760
  %79 = vmatprep.subr.mxu0 %v78
  %v80 = vand.u32 %v42, 4294901760
  %81 = vmatpush1.msra.mxu0 %v80
  %v82 = vand.u32 %v35, 4294901760
  %83 = vmatprep.subr.mxu0 %v82
  %v84 = vand.u32 %v34, 4294901760
  %85 = vmatpush1.msra.mxu0 %v84
  %v86 = vand.u32 %v27, 4294901760
  %87 = vmatprep.subr.mxu0 %v86
  %v88 = vand.u32 %v26, 4294901760
  %89 = vmatpush1.msra.mxu0 %v88
  %v90 = vand.u32 %v19, 4294901760
  %91 = vmatprep.subr.mxu0 %v90
  %v92 = vand.u32 %v18, 4294901760
  %93 = vmatpush1.msra.mxu0 %v92
  %94 = vmatprep.subr.mxu0 0.0
  %95 = vmatpush2.msra.mxu0 0.0
  %96 = vmatprep.subr.mxu0 0.0
  %97 = vmatpush2.msra.mxu0 0.0
  %98 = vmatprep.subr.mxu0 0.0
  %99 = vmatpush2.msra.mxu0 0.0
  %100 = vmatprep.subr.mxu0 0.0
  %101 = vmatpush2.msra.mxu0 0.0
  %102 = vmatprep.subr.mxu0 0.0
  %103 = vmatpush2.msra.mxu0 0.0
  %104 = vmatprep.subr.mxu0 0.0
  %105 = vmatpush2.msra.mxu0 0.0
  %106 = vmatprep.subr.mxu0 0.0
  %107 = vmatpush2.msra.mxu0 0.0
  %108 = vmatprep.subr.mxu0 0.0
  %109 = vmatpush2.msra.mxu0 0.0
  %110 = vmatprep.subr.mxu0 0.0
  %111 = vmatpush2.msra.mxu0 0.0
  %112 = vmatprep.subr.mxu0 0.0
  %113 = vmatpush2.msra.mxu0 0.0
  %114 = vmatprep.subr.mxu0 0.0
  %115 = vmatpush2.msra.mxu0 0.0
  %116 = vmatprep.subr.mxu0 0.0
  %117 = vmatpush2.msra.mxu0 0.0
  %118 = vmatprep.subr.mxu0 0.0
  %119 = vmatpush2.msra.mxu0 0.0
  %120 = vmatprep.subr.mxu0 0.0
  %121 = vmatpush2.msra.mxu0 0.0
  %122 = vmatprep.subr.mxu0 0.0
  %123 = vmatpush2.msra.mxu0 0.0
  %124 = vmatprep.subr.mxu0 0.0
  %125 = vmatpush2.msra.mxu0 0.0
  %126 = vmatprep.mubr.f32.mxu0 0.0
  %v127 = vand.u32 %v52, 4294901760
  %v128 = vsub.f32 %v52, %v127
  %v129 = vand.u32 %v128, 4294901760
  %v130 = vsub.f32 %v128, %v129
  %v131 = vand.u32 %v130, 4294901760
  %132 = vmatmul.mubr.f32.gmra.mxu0 %v131
  %v133 = vpop.f32.mrf.mxu0
  %v134 = vadd.f32 0.0, %v133
  %v135 = vpop.f32.mrf.mxu0
  %v136 = vadd.f32 0.0, %v135
  %137 = vdwg.mxu0
  %138 = vmatprep.subr.mxu0 0.0
  %139 = vmatpush1.msra.mxu0 0.0
  %140 = vmatprep.subr.mxu0 0.0
  %141 = vmatpush1.msra.mxu0 0.0
  %142 = vmatprep.subr.mxu0 0.0
  %143 = vmatpush1.msra.mxu0 0.0
  %144 = vmatprep.subr.mxu0 0.0
  %145 = vmatpush1.msra.mxu0 0.0
  %146 = vmatprep.subr.mxu0 0.0
  %147 = vmatpush1.msra.mxu0 0.0
  %148 = vmatprep.subr.mxu0 0.0
  %149 = vmatpush1.msra.mxu0 0.0
  %150 = vmatprep.subr.mxu0 0.0
  %151 = vmatpush1.msra.mxu0 0.0
  %152 = vmatprep.subr.mxu0 0.0
  %153 = vmatpush1.msra.mxu0 0.0
  %154 = vmatprep.subr.mxu0 0.0
  %155 = vmatpush1.msra.mxu0 0.0
  %156 = vmatprep.subr.mxu0 0.0
  %157 = vmatpush1.msra.mxu0 0.0
  %158 = vmatprep.subr.mxu0 0.0
  %159 = vmatpush1.msra.mxu0 0.0
  %160 = vmatprep.subr.mxu0 0.0
  %161 = vmatpush1.msra.mxu0 0.0
  %v162 = vand.u32 %v43, 4294901760
  %v163 = vsub.f32 %v43, %v162
  %v164 = vand.u32 %v163, 4294901760
  %v165 = vsub.f32 %v163, %v164
  %v166 = vand.u32 %v165, 4294901760
  %167 = vmatprep.subr.mxu0 %v166
  %v168 = vand.u32 %v42, 4294901760
  %v169 = vsub.f32 %v42, %v168
  %v170 = vand.u32 %v169, 4294901760
  %v171 = vsub.f32 %v169, %v170
  %v172 = vand.u32 %v171, 4294901760
  %173 = vmatpush1.msra.mxu0 %v172
  %v174 = vand.u32 %v35, 4294901760
  %v175 = vsub.f32 %v35, %v174
  %v176 = vand.u32 %v175, 4294901760
  %v177 = vsub.f32 %v175, %v176
  %v178 = vand.u32 %v177, 4294901760
  %179 = vmatprep.subr.mxu0 %v178
  %v180 = vand.u32 %v34, 4294901760
  %v181 = vsub.f32 %v34, %v180
  %v182 = vand.u32 %v181, 4294901760
  %v183 = vsub.f32 %v181, %v182
  %v184 = vand.u32 %v183, 4294901760
  %185 = vmatpush1.msra.mxu0 %v184
  %v186 = vand.u32 %v27, 4294901760
  %v187 = vsub.f32 %v27, %v186
  %v188 = vand.u32 %v187, 4294901760
  %v189 = vsub.f32 %v187, %v188
  %v190 = vand.u32 %v189, 4294901760
  %191 = vmatprep.subr.mxu0 %v190
  %v192 = vand.u32 %v26, 4294901760
  %v193 = vsub.f32 %v26, %v192
  %v194 = vand.u32 %v193, 4294901760
  %v195 = vsub.f32 %v193, %v194
  %v196 = vand.u32 %v195, 4294901760
  %197 = vmatpush1.msra.mxu0 %v196
  %v198 = vand.u32 %v19, 4294901760
  %v199 = vsub.f32 %v19, %v198
  %v200 = vand.u32 %v199, 4294901760
  %v201 = vsub.f32 %v199, %v200
  %v202 = vand.u32 %v201, 4294901760
  %203 = vmatprep.subr.mxu0 %v202
  %v204 = vand.u32 %v18, 4294901760
  %v205 = vsub.f32 %v18, %v204
  %v206 = vand.u32 %v205, 4294901760
  %v207 = vsub.f32 %v205, %v206
  %v208 = vand.u32 %v207, 4294901760
  %209 = vmatpush1.msra.mxu0 %v208
  %210 = vmatprep.subr.mxu0 0.0
  %211 = vmatpush2.msra.mxu0 0.0
  %212 = vmatprep.subr.mxu0 0.0
  %213 = vmatpush2.msra.mxu0 0.0
  %214 = vmatprep.subr.mxu0 0.0
  %215 = vmatpush2.msra.mxu0 0.0
  %216 = vmatprep.subr.mxu0 0.0
  %217 = vmatpush2.msra.mxu0 0.0
  %218 = vmatprep.subr.mxu0 0.0
  %219 = vmatpush2.msra.mxu0 0.0
  %220 = vmatprep.subr.mxu0 0.0
  %221 = vmatpush2.msra.mxu0 0.0
  %222 = vmatprep.subr.mxu0 0.0
  %223 = vmatpush2.msra.mxu0 0.0
  %224 = vmatprep.subr.mxu0 0.0
  %225 = vmatpush2.msra.mxu0 0.0
  %226 = vmatprep.subr.mxu0 0.0
  %227 = vmatpush2.msra.mxu0 0.0
  %228 = vmatprep.subr.mxu0 0.0
  %229 = vmatpush2.msra.mxu0 0.0
  %230 = vmatprep.subr.mxu0 0.0
  %231 = vmatpush2.msra.mxu0 0.0
  %232 = vmatprep.subr.mxu0 0.0
  %233 = vmatpush2.msra.mxu0 0.0
  %234 = vmatprep.subr.mxu0 0.0
  %235 = vmatpush2.msra.mxu0 0.0
  %236 = vmatprep.subr.mxu0 0.0
  %237 = vmatpush2.msra.mxu0 0.0
  %238 = vmatprep.subr.mxu0 0.0
  %239 = vmatpush2.msra.mxu0 0.0
  %240 = vmatprep.subr.mxu0 0.0
  %241 = vmatpush2.msra.mxu0 0.0
  %242 = vmatprep.mubr.f32.mxu0 0.0
  %v243 = vand.u32 %v52, 4294901760
  %244 = vmatmul.mubr.f32.gmra.mxu0 %v243
  %v245 = vpop.f32.mrf.mxu0
  %v246 = vadd.f32 %v134, %v245
  %v247 = vpop.f32.mrf.mxu0
  %v248 = vadd.f32 %v136, %v247
  %249 = vdwg.mxu0
  %250 = vmatprep.subr.mxu0 0.0
  %251 = vmatpush1.msra.mxu0 0.0
  %252 = vmatprep.subr.mxu0 0.0
  %253 = vmatpush1.msra.mxu0 0.0
  %254 = vmatprep.subr.mxu0 0.0
  %255 = vmatpush1.msra.mxu0 0.0
  %256 = vmatprep.subr.mxu0 0.0
  %257 = vmatpush1.msra.mxu0 0.0
  %258 = vmatprep.subr.mxu0 0.0
  %259 = vmatpush1.msra.mxu0 0.0
  %260 = vmatprep.subr.mxu0 0.0
  %261 = vmatpush1.msra.mxu0 0.0
  %262 = vmatprep.subr.mxu0 0.0
  %263 = vmatpush1.msra.mxu0 0.0
  %264 = vmatprep.subr.mxu0 0.0
  %265 = vmatpush1.msra.mxu0 0.0
  %266 = vmatprep.subr.mxu0 0.0
  %267 = vmatpush1.msra.mxu0 0.0
  %268 = vmatprep.subr.mxu0 0.0
  %269 = vmatpush1.msra.mxu0 0.0
  %270 = vmatprep.subr.mxu0 0.0
  %271 = vmatpush1.msra.mxu0 0.0
  %272 = vmatprep.subr.mxu0 0.0
  %273 = vmatpush1.msra.mxu0 0.0
  %v274 = vand.u32 %v43, 4294901760
  %v275 = vsub.f32 %v43, %v274
  %276 = vmatprep.subr.mxu0 %v275
  %v277 = vand.u32 %v42, 4294901760
  %v278 = vsub.f32 %v42, %v277
  %279 = vmatpush1.msra.mxu0 %v278
  %v280 = vand.u32 %v35, 4294901760
  %v281 = vsub.f32 %v35, %v280
  %282 = vmatprep.subr.mxu0 %v281
  %v283 = vand.u32 %v34, 4294901760
  %v284 = vsub.f32 %v34, %v283
  %285 = vmatpush1.msra.mxu0 %v284
  %v286 = vand.u32 %v27, 4294901760
  %v287 = vsub.f32 %v27, %v286
  %288 = vmatprep.subr.mxu0 %v287
  %v289 = vand.u32 %v26, 4294901760
  %v290 = vsub.f32 %v26, %v289
  %291 = vmatpush1.msra.mxu0 %v290
  %v292 = vand.u32 %v19, 4294901760
  %v293 = vsub.f32 %v19, %v292
  %294 = vmatprep.subr.mxu0 %v293
  %v295 = vand.u32 %v18, 4294901760
  %v296 = vsub.f32 %v18, %v295
  %297 = vmatpush1.msra.mxu0 %v296
  %298 = vmatprep.subr.mxu0 0.0
  %299 = vmatpush2.msra.mxu0 0.0
  %300 = vmatprep.subr.mxu0 0.0
  %301 = vmatpush2.msra.mxu0 0.0
  %302 = vmatprep.subr.mxu0 0.0
  %303 = vmatpush2.msra.mxu0 0.0
  %304 = vmatprep.subr.mxu0 0.0
  %305 = vmatpush2.msra.mxu0 0.0
  %306 = vmatprep.subr.mxu0 0.0
  %307 = vmatpush2.msra.mxu0 0.0
  %308 = vmatprep.subr.mxu0 0.0
  %309 = vmatpush2.msra.mxu0 0.0
  %310 = vmatprep.subr.mxu0 0.0
  %311 = vmatpush2.msra.mxu0 0.0
  %312 = vmatprep.subr.mxu0 0.0
  %313 = vmatpush2.msra.mxu0 0.0
  %314 = vmatprep.subr.mxu0 0.0
  %315 = vmatpush2.msra.mxu0 0.0
  %316 = vmatprep.subr.mxu0 0.0
  %317 = vmatpush2.msra.mxu0 0.0
  %318 = vmatprep.subr.mxu0 0.0
  %319 = vmatpush2.msra.mxu0 0.0
  %320 = vmatprep.subr.mxu0 0.0
  %321 = vmatpush2.msra.mxu0 0.0
  %322 = vmatprep.subr.mxu0 0.0
  %323 = vmatpush2.msra.mxu0 0.0
  %324 = vmatprep.subr.mxu0 0.0
  %325 = vmatpush2.msra.mxu0 0.0
  %326 = vmatprep.subr.mxu0 0.0
  %327 = vmatpush2.msra.mxu0 0.0
  %328 = vmatprep.subr.mxu0 0.0
  %329 = vmatpush2.msra.mxu0 0.0
  %330 = vmatprep.mubr.f32.mxu0 0.0
  %v331 = vand.u32 %v52, 4294901760
  %v332 = vsub.f32 %v52, %v331
  %333 = vmatmul.mubr.f32.gmra.mxu0 %v332
  %v334 = vpop.f32.mrf.mxu0
  %v335 = vadd.f32 %v246, %v334
  %v336 = vpop.f32.mrf.mxu0
  %v337 = vadd.f32 %v248, %v336
  %338 = vdwg.mxu0
  %339 = vmatprep.subr.mxu0 0.0
  %340 = vmatpush1.msra.mxu0 0.0
  %341 = vmatprep.subr.mxu0 0.0
  %342 = vmatpush1.msra.mxu0 0.0
  %343 = vmatprep.subr.mxu0 0.0
  %344 = vmatpush1.msra.mxu0 0.0
  %345 = vmatprep.subr.mxu0 0.0
  %346 = vmatpush1.msra.mxu0 0.0
  %347 = vmatprep.subr.mxu0 0.0
  %348 = vmatpush1.msra.mxu0 0.0
  %349 = vmatprep.subr.mxu0 0.0
  %350 = vmatpush1.msra.mxu0 0.0
  %351 = vmatprep.subr.mxu0 0.0
  %352 = vmatpush1.msra.mxu0 0.0
  %353 = vmatprep.subr.mxu0 0.0
  %354 = vmatpush1.msra.mxu0 0.0
  %355 = vmatprep.subr.mxu0 0.0
  %356 = vmatpush1.msra.mxu0 0.0
  %357 = vmatprep.subr.mxu0 0.0
  %358 = vmatpush1.msra.mxu0 0.0
  %359 = vmatprep.subr.mxu0 0.0
  %360 = vmatpush1.msra.mxu0 0.0
  %361 = vmatprep.subr.mxu0 0.0
  %362 = vmatpush1.msra.mxu0 0.0
  %v363 = vand.u32 %v43, 4294901760
  %364 = vmatprep.subr.mxu0 %v363
  %v365 = vand.u32 %v42, 4294901760
  %366 = vmatpush1.msra.mxu0 %v365
  %v367 = vand.u32 %v35, 4294901760
  %368 = vmatprep.subr.mxu0 %v367
  %v369 = vand.u32 %v34, 4294901760
  %370 = vmatpush1.msra.mxu0 %v369
  %v371 = vand.u32 %v27, 4294901760
  %372 = vmatprep.subr.mxu0 %v371
  %v373 = vand.u32 %v26, 4294901760
  %374 = vmatpush1.msra.mxu0 %v373
  %v375 = vand.u32 %v19, 4294901760
  %376 = vmatprep.subr.mxu0 %v375
  %v377 = vand.u32 %v18, 4294901760
  %378 = vmatpush1.msra.mxu0 %v377
  %379 = vmatprep.subr.mxu0 0.0
  %380 = vmatpush2.msra.mxu0 0.0
  %381 = vmatprep.subr.mxu0 0.0
  %382 = vmatpush2.msra.mxu0 0.0
  %383 = vmatprep.subr.mxu0 0.0
  %384 = vmatpush2.msra.mxu0 0.0
  %385 = vmatprep.subr.mxu0 0.0
  %386 = vmatpush2.msra.mxu0 0.0
  %387 = vmatprep.subr.mxu0 0.0
  %388 = vmatpush2.msra.mxu0 0.0
  %389 = vmatprep.subr.mxu0 0.0
  %390 = vmatpush2.msra.mxu0 0.0
  %391 = vmatprep.subr.mxu0 0.0
  %392 = vmatpush2.msra.mxu0 0.0
  %393 = vmatprep.subr.mxu0 0.0
  %394 = vmatpush2.msra.mxu0 0.0
  %395 = vmatprep.subr.mxu0 0.0
  %396 = vmatpush2.msra.mxu0 0.0
  %397 = vmatprep.subr.mxu0 0.0
  %398 = vmatpush2.msra.mxu0 0.0
  %399 = vmatprep.subr.mxu0 0.0
  %400 = vmatpush2.msra.mxu0 0.0
  %401 = vmatprep.subr.mxu0 0.0
  %402 = vmatpush2.msra.mxu0 0.0
  %403 = vmatprep.subr.mxu0 0.0
  %404 = vmatpush2.msra.mxu0 0.0
  %405 = vmatprep.subr.mxu0 0.0
  %406 = vmatpush2.msra.mxu0 0.0
  %407 = vmatprep.subr.mxu0 0.0
  %408 = vmatpush2.msra.mxu0 0.0
  %409 = vmatprep.subr.mxu0 0.0
  %410 = vmatpush2.msra.mxu0 0.0
  %411 = vmatprep.mubr.f32.mxu0 0.0
  %v412 = vand.u32 %v52, 4294901760
  %v413 = vsub.f32 %v52, %v412
  %v414 = vand.u32 %v413, 4294901760
  %415 = vmatmul.mubr.f32.gmra.mxu0 %v414
  %v416 = vpop.f32.mrf.mxu0
  %v417 = vadd.f32 %v335, %v416
  %v418 = vpop.f32.mrf.mxu0
  %v419 = vadd.f32 %v337, %v418
  %420 = vdwg.mxu0
  %421 = vmatprep.subr.mxu0 0.0
  %422 = vmatpush1.msra.mxu0 0.0
  %423 = vmatprep.subr.mxu0 0.0
  %424 = vmatpush1.msra.mxu0 0.0
  %425 = vmatprep.subr.mxu0 0.0
  %426 = vmatpush1.msra.mxu0 0.0
  %427 = vmatprep.subr.mxu0 0.0
  %428 = vmatpush1.msra.mxu0 0.0
  %429 = vmatprep.subr.mxu0 0.0
  %430 = vmatpush1.msra.mxu0 0.0
  %431 = vmatprep.subr.mxu0 0.0
  %432 = vmatpush1.msra.mxu0 0.0
  %433 = vmatprep.subr.mxu0 0.0
  %434 = vmatpush1.msra.mxu0 0.0
  %435 = vmatprep.subr.mxu0 0.0
  %436 = vmatpush1.msra.mxu0 0.0
  %437 = vmatprep.subr.mxu0 0.0
  %438 = vmatpush1.msra.mxu0 0.0
  %439 = vmatprep.subr.mxu0 0.0
  %440 = vmatpush1.msra.mxu0 0.0
  %441 = vmatprep.subr.mxu0 0.0
  %442 = vmatpush1.msra.mxu0 0.0
  %443 = vmatprep.subr.mxu0 0.0
  %444 = vmatpush1.msra.mxu0 0.0
  %v445 = vand.u32 %v43, 4294901760
  %v446 = vsub.f32 %v43, %v445
  %v447 = vand.u32 %v446, 4294901760
  %448 = vmatprep.subr.mxu0 %v447
  %v449 = vand.u32 %v42, 4294901760
  %v450 = vsub.f32 %v42, %v449
  %v451 = vand.u32 %v450, 4294901760
  %452 = vmatpush1.msra.mxu0 %v451
  %v453 = vand.u32 %v35, 4294901760
  %v454 = vsub.f32 %v35, %v453
  %v455 = vand.u32 %v454, 4294901760
  %456 = vmatprep.subr.mxu0 %v455
  %v457 = vand.u32 %v34, 4294901760
  %v458 = vsub.f32 %v34, %v457
  %v459 = vand.u32 %v458, 4294901760
  %460 = vmatpush1.msra.mxu0 %v459
  %v461 = vand.u32 %v27, 4294901760
  %v462 = vsub.f32 %v27, %v461
  %v463 = vand.u32 %v462, 4294901760
  %464 = vmatprep.subr.mxu0 %v463
  %v465 = vand.u32 %v26, 4294901760
  %v466 = vsub.f32 %v26, %v465
  %v467 = vand.u32 %v466, 4294901760
  %468 = vmatpush1.msra.mxu0 %v467
  %v469 = vand.u32 %v19, 4294901760
  %v470 = vsub.f32 %v19, %v469
  %v471 = vand.u32 %v470, 4294901760
  %472 = vmatprep.subr.mxu0 %v471
  %v473 = vand.u32 %v18, 4294901760
  %v474 = vsub.f32 %v18, %v473
  %v475 = vand.u32 %v474, 4294901760
  %476 = vmatpush1.msra.mxu0 %v475
  %477 = vmatprep.subr.mxu0 0.0
  %478 = vmatpush2.msra.mxu0 0.0
  %479 = vmatprep.subr.mxu0 0.0
  %480 = vmatpush2.msra.mxu0 0.0
  %481 = vmatprep.subr.mxu0 0.0
  %482 = vmatpush2.msra.mxu0 0.0
  %483 = vmatprep.subr.mxu0 0.0
  %484 = vmatpush2.msra.mxu0 0.0
  %485 = vmatprep.subr.mxu0 0.0
  %486 = vmatpush2.msra.mxu0 0.0
  %487 = vmatprep.subr.mxu0 0.0
  %488 = vmatpush2.msra.mxu0 0.0
  %489 = vmatprep.subr.mxu0 0.0
  %490 = vmatpush2.msra.mxu0 0.0
  %491 = vmatprep.subr.mxu0 0.0
  %492 = vmatpush2.msra.mxu0 0.0
  %493 = vmatprep.subr.mxu0 0.0
  %494 = vmatpush2.msra.mxu0 0.0
  %495 = vmatprep.subr.mxu0 0.0
  %496 = vmatpush2.msra.mxu0 0.0
  %497 = vmatprep.subr.mxu0 0.0
  %498 = vmatpush2.msra.mxu0 0.0
  %499 = vmatprep.subr.mxu0 0.0
  %500 = vmatpush2.msra.mxu0 0.0
  %501 = vmatprep.subr.mxu0 0.0
  %502 = vmatpush2.msra.mxu0 0.0
  %503 = vmatprep.subr.mxu0 0.0
  %504 = vmatpush2.msra.mxu0 0.0
  %505 = vmatprep.subr.mxu0 0.0
  %506 = vmatpush2.msra.mxu0 0.0
  %507 = vmatprep.subr.mxu0 0.0
  %508 = vmatpush2.msra.mxu0 0.0
  %509 = vmatprep.mubr.f32.mxu0 0.0
  %v510 = vand.u32 %v52, 4294901760
  %511 = vmatmul.mubr.f32.gmra.mxu0 %v510
  %v512 = vpop.f32.mrf.mxu0
  %v513 = vadd.f32 %v417, %v512
  %v514 = vpop.f32.mrf.mxu0
  %v515 = vadd.f32 %v419, %v514
  %516 = vdwg.mxu0
  %517 = vmatprep.subr.mxu0 0.0
  %518 = vmatpush1.msra.mxu0 0.0
  %519 = vmatprep.subr.mxu0 0.0
  %520 = vmatpush1.msra.mxu0 0.0
  %521 = vmatprep.subr.mxu0 0.0
  %522 = vmatpush1.msra.mxu0 0.0
  %523 = vmatprep.subr.mxu0 0.0
  %524 = vmatpush1.msra.mxu0 0.0
  %525 = vmatprep.subr.mxu0 0.0
  %526 = vmatpush1.msra.mxu0 0.0
  %527 = vmatprep.subr.mxu0 0.0
  %528 = vmatpush1.msra.mxu0 0.0
  %529 = vmatprep.subr.mxu0 0.0
  %530 = vmatpush1.msra.mxu0 0.0
  %531 = vmatprep.subr.mxu0 0.0
  %532 = vmatpush1.msra.mxu0 0.0
  %533 = vmatprep.subr.mxu0 0.0
  %534 = vmatpush1.msra.mxu0 0.0
  %535 = vmatprep.subr.mxu0 0.0
  %536 = vmatpush1.msra.mxu0 0.0
  %537 = vmatprep.subr.mxu0 0.0
  %538 = vmatpush1.msra.mxu0 0.0
  %539 = vmatprep.subr.mxu0 0.0
  %540 = vmatpush1.msra.mxu0 0.0
  %v541 = vand.u32 %v43, 4294901760
  %542 = vmatprep.subr.mxu0 %v541
  %v543 = vand.u32 %v42, 4294901760
  %544 = vmatpush1.msra.mxu0 %v543
  %v545 = vand.u32 %v35, 4294901760
  %546 = vmatprep.subr.mxu0 %v545
  %v547 = vand.u32 %v34, 4294901760
  %548 = vmatpush1.msra.mxu0 %v547
  %v549 = vand.u32 %v27, 4294901760
  %550 = vmatprep.subr.mxu0 %v549
  %v551 = vand.u32 %v26, 4294901760
  %552 = vmatpush1.msra.mxu0 %v551
  %v553 = vand.u32 %v19, 4294901760
  %554 = vmatprep.subr.mxu0 %v553
  %v555 = vand.u32 %v18, 4294901760
  %556 = vmatpush1.msra.mxu0 %v555
  %557 = vmatprep.subr.mxu0 0.0
  %558 = vmatpush2.msra.mxu0 0.0
  %559 = vmatprep.subr.mxu0 0.0
  %560 = vmatpush2.msra.mxu0 0.0
  %561 = vmatprep.subr.mxu0 0.0
  %562 = vmatpush2.msra.mxu0 0.0
  %563 = vmatprep.subr.mxu0 0.0
  %564 = vmatpush2.msra.mxu0 0.0
  %565 = vmatprep.subr.mxu0 0.0
  %566 = vmatpush2.msra.mxu0 0.0
  %567 = vmatprep.subr.mxu0 0.0
  %568 = vmatpush2.msra.mxu0 0.0
  %569 = vmatprep.subr.mxu0 0.0
  %570 = vmatpush2.msra.mxu0 0.0
  %571 = vmatprep.subr.mxu0 0.0
  %572 = vmatpush2.msra.mxu0 0.0
  %573 = vmatprep.subr.mxu0 0.0
  %574 = vmatpush2.msra.mxu0 0.0
  %575 = vmatprep.subr.mxu0 0.0
  %576 = vmatpush2.msra.mxu0 0.0
  %577 = vmatprep.subr.mxu0 0.0
  %578 = vmatpush2.msra.mxu0 0.0
  %579 = vmatprep.subr.mxu0 0.0
  %580 = vmatpush2.msra.mxu0 0.0
  %581 = vmatprep.subr.mxu0 0.0
  %582 = vmatpush2.msra.mxu0 0.0
  %583 = vmatprep.subr.mxu0 0.0
  %584 = vmatpush2.msra.mxu0 0.0
  %585 = vmatprep.subr.mxu0 0.0
  %586 = vmatpush2.msra.mxu0 0.0
  %587 = vmatprep.subr.mxu0 0.0
  %588 = vmatpush2.msra.mxu0 0.0
  %589 = vmatprep.mubr.f32.mxu0 0.0
  %v590 = vand.u32 %v52, 4294901760
  %591 = vmatmul.mubr.f32.gmra.mxu0 %v590
  %v592 = vpop.f32.mrf.mxu0
  %v593 = vadd.f32 %v513, %v592
  %v594 = vpop.f32.mrf.mxu0
  %v595 = vadd.f32 %v515, %v594
  %596 = vdwg.mxu0
  %597 = vmatprep.subr.mxu0 0.0
  %598 = vmatpush1.msra.mxu0 0.0
  %599 = vmatprep.subr.mxu0 0.0
  %600 = vmatpush1.msra.mxu0 0.0
  %601 = vmatprep.subr.mxu0 0.0
  %602 = vmatpush1.msra.mxu0 0.0
  %603 = vmatprep.subr.mxu0 0.0
  %604 = vmatpush1.msra.mxu0 0.0
  %605 = vmatprep.subr.mxu0 0.0
  %606 = vmatpush1.msra.mxu0 0.0
  %607 = vmatprep.subr.mxu0 0.0
  %608 = vmatpush1.msra.mxu0 0.0
  %609 = vmatprep.subr.mxu0 0.0
  %610 = vmatpush1.msra.mxu0 0.0
  %611 = vmatprep.subr.mxu0 0.0
  %612 = vmatpush1.msra.mxu0 0.0
  %613 = vmatprep.subr.mxu0 0.0
  %614 = vmatpush1.msra.mxu0 0.0
  %615 = vmatprep.subr.mxu0 0.0
  %616 = vmatpush1.msra.mxu0 0.0
  %617 = vmatprep.subr.mxu0 0.0
  %618 = vmatpush1.msra.mxu0 0.0
  %619 = vmatprep.subr.mxu0 0.0
  %620 = vmatpush1.msra.mxu0 0.0
  %v621 = vand.u32 %v45, 4294901760
  %622 = vmatprep.subr.mxu0 %v621
  %v623 = vand.u32 %v44, 4294901760
  %624 = vmatpush1.msra.mxu0 %v623
  %v625 = vand.u32 %v37, 4294901760
  %626 = vmatprep.subr.mxu0 %v625
  %v627 = vand.u32 %v36, 4294901760
  %628 = vmatpush1.msra.mxu0 %v627
  %v629 = vand.u32 %v29, 4294901760
  %630 = vmatprep.subr.mxu0 %v629
  %v631 = vand.u32 %v28, 4294901760
  %632 = vmatpush1.msra.mxu0 %v631
  %v633 = vand.u32 %v21, 4294901760
  %634 = vmatprep.subr.mxu0 %v633
  %v635 = vand.u32 %v20, 4294901760
  %636 = vmatpush1.msra.mxu0 %v635
  %637 = vmatprep.subr.mxu0 0.0
  %638 = vmatpush2.msra.mxu0 0.0
  %639 = vmatprep.subr.mxu0 0.0
  %640 = vmatpush2.msra.mxu0 0.0
  %641 = vmatprep.subr.mxu0 0.0
  %642 = vmatpush2.msra.mxu0 0.0
  %643 = vmatprep.subr.mxu0 0.0
  %644 = vmatpush2.msra.mxu0 0.0
  %645 = vmatprep.subr.mxu0 0.0
  %646 = vmatpush2.msra.mxu0 0.0
  %647 = vmatprep.subr.mxu0 0.0
  %648 = vmatpush2.msra.mxu0 0.0
  %649 = vmatprep.subr.mxu0 0.0
  %650 = vmatpush2.msra.mxu0 0.0
  %651 = vmatprep.subr.mxu0 0.0
  %652 = vmatpush2.msra.mxu0 0.0
  %653 = vmatprep.subr.mxu0 0.0
  %654 = vmatpush2.msra.mxu0 0.0
  %655 = vmatprep.subr.mxu0 0.0
  %656 = vmatpush2.msra.mxu0 0.0
  %657 = vmatprep.subr.mxu0 0.0
  %658 = vmatpush2.msra.mxu0 0.0
  %659 = vmatprep.subr.mxu0 0.0
  %660 = vmatpush2.msra.mxu0 0.0
  %661 = vmatprep.subr.mxu0 0.0
  %662 = vmatpush2.msra.mxu0 0.0
  %663 = vmatprep.subr.mxu0 0.0
  %664 = vmatpush2.msra.mxu0 0.0
  %665 = vmatprep.subr.mxu0 0.0
  %666 = vmatpush2.msra.mxu0 0.0
  %667 = vmatprep.subr.mxu0 0.0
  %668 = vmatpush2.msra.mxu0 0.0
  %669 = vmatprep.mubr.f32.mxu0 0.0
  %v670 = vand.u32 %v52, 4294901760
  %v671 = vsub.f32 %v52, %v670
  %v672 = vand.u32 %v671, 4294901760
  %v673 = vsub.f32 %v671, %v672
  %v674 = vand.u32 %v673, 4294901760
  %675 = vmatmul.mubr.f32.gmra.mxu0 %v674
  %v676 = vpop.f32.mrf.mxu0
  %v677 = vadd.f32 0.0, %v676
  %v678 = vpop.f32.mrf.mxu0
  %v679 = vadd.f32 0.0, %v678
  %680 = vdwg.mxu0
  %681 = vmatprep.subr.mxu0 0.0
  %682 = vmatpush1.msra.mxu0 0.0
  %683 = vmatprep.subr.mxu0 0.0
  %684 = vmatpush1.msra.mxu0 0.0
  %685 = vmatprep.subr.mxu0 0.0
  %686 = vmatpush1.msra.mxu0 0.0
  %687 = vmatprep.subr.mxu0 0.0
  %688 = vmatpush1.msra.mxu0 0.0
  %689 = vmatprep.subr.mxu0 0.0
  %690 = vmatpush1.msra.mxu0 0.0
  %691 = vmatprep.subr.mxu0 0.0
  %692 = vmatpush1.msra.mxu0 0.0
  %693 = vmatprep.subr.mxu0 0.0
  %694 = vmatpush1.msra.mxu0 0.0
  %695 = vmatprep.subr.mxu0 0.0
  %696 = vmatpush1.msra.mxu0 0.0
  %697 = vmatprep.subr.mxu0 0.0
  %698 = vmatpush1.msra.mxu0 0.0
  %699 = vmatprep.subr.mxu0 0.0
  %700 = vmatpush1.msra.mxu0 0.0
  %701 = vmatprep.subr.mxu0 0.0
  %702 = vmatpush1.msra.mxu0 0.0
  %703 = vmatprep.subr.mxu0 0.0
  %704 = vmatpush1.msra.mxu0 0.0
  %v705 = vand.u32 %v45, 4294901760
  %v706 = vsub.f32 %v45, %v705
  %v707 = vand.u32 %v706, 4294901760
  %v708 = vsub.f32 %v706, %v707
  %v709 = vand.u32 %v708, 4294901760
  %710 = vmatprep.subr.mxu0 %v709
  %v711 = vand.u32 %v44, 4294901760
  %v712 = vsub.f32 %v44, %v711
  %v713 = vand.u32 %v712, 4294901760
  %v714 = vsub.f32 %v712, %v713
  %v715 = vand.u32 %v714, 4294901760
  %716 = vmatpush1.msra.mxu0 %v715
  %v717 = vand.u32 %v37, 4294901760
  %v718 = vsub.f32 %v37, %v717
  %v719 = vand.u32 %v718, 4294901760
  %v720 = vsub.f32 %v718, %v719
  %v721 = vand.u32 %v720, 4294901760
  %722 = vmatprep.subr.mxu0 %v721
  %v723 = vand.u32 %v36, 4294901760
  %v724 = vsub.f32 %v36, %v723
  %v725 = vand.u32 %v724, 4294901760
  %v726 = vsub.f32 %v724, %v725
  %v727 = vand.u32 %v726, 4294901760
  %728 = vmatpush1.msra.mxu0 %v727
  %v729 = vand.u32 %v29, 4294901760
  %v730 = vsub.f32 %v29, %v729
  %v731 = vand.u32 %v730, 4294901760
  %v732 = vsub.f32 %v730, %v731
  %v733 = vand.u32 %v732, 4294901760
  %734 = vmatprep.subr.mxu0 %v733
  %v735 = vand.u32 %v28, 4294901760
  %v736 = vsub.f32 %v28, %v735
  %v737 = vand.u32 %v736, 4294901760
  %v738 = vsub.f32 %v736, %v737
  %v739 = vand.u32 %v738, 4294901760
  %740 = vmatpush1.msra.mxu0 %v739
  %v741 = vand.u32 %v21, 4294901760
  %v742 = vsub.f32 %v21, %v741
  %v743 = vand.u32 %v742, 4294901760
  %v744 = vsub.f32 %v742, %v743
  %v745 = vand.u32 %v744, 4294901760
  %746 = vmatprep.subr.mxu0 %v745
  %v747 = vand.u32 %v20, 4294901760
  %v748 = vsub.f32 %v20, %v747
  %v749 = vand.u32 %v748, 4294901760
  %v750 = vsub.f32 %v748, %v749
  %v751 = vand.u32 %v750, 4294901760
  %752 = vmatpush1.msra.mxu0 %v751
  %753 = vmatprep.subr.mxu0 0.0
  %754 = vmatpush2.msra.mxu0 0.0
  %755 = vmatprep.subr.mxu0 0.0
  %756 = vmatpush2.msra.mxu0 0.0
  %757 = vmatprep.subr.mxu0 0.0
  %758 = vmatpush2.msra.mxu0 0.0
  %759 = vmatprep.subr.mxu0 0.0
  %760 = vmatpush2.msra.mxu0 0.0
  %761 = vmatprep.subr.mxu0 0.0
  %762 = vmatpush2.msra.mxu0 0.0
  %763 = vmatprep.subr.mxu0 0.0
  %764 = vmatpush2.msra.mxu0 0.0
  %765 = vmatprep.subr.mxu0 0.0
  %766 = vmatpush2.msra.mxu0 0.0
  %767 = vmatprep.subr.mxu0 0.0
  %768 = vmatpush2.msra.mxu0 0.0
  %769 = vmatprep.subr.mxu0 0.0
  %770 = vmatpush2.msra.mxu0 0.0
  %771 = vmatprep.subr.mxu0 0.0
  %772 = vmatpush2.msra.mxu0 0.0
  %773 = vmatprep.subr.mxu0 0.0
  %774 = vmatpush2.msra.mxu0 0.0
  %775 = vmatprep.subr.mxu0 0.0
  %776 = vmatpush2.msra.mxu0 0.0
  %777 = vmatprep.subr.mxu0 0.0
  %778 = vmatpush2.msra.mxu0 0.0
  %779 = vmatprep.subr.mxu0 0.0
  %780 = vmatpush2.msra.mxu0 0.0
  %781 = vmatprep.subr.mxu0 0.0
  %782 = vmatpush2.msra.mxu0 0.0
  %783 = vmatprep.subr.mxu0 0.0
  %784 = vmatpush2.msra.mxu0 0.0
  %785 = vmatprep.mubr.f32.mxu0 0.0
  %v786 = vand.u32 %v52, 4294901760
  %787 = vmatmul.mubr.f32.gmra.mxu0 %v786
  %v788 = vpop.f32.mrf.mxu0
  %v789 = vadd.f32 %v677, %v788
  %v790 = vpop.f32.mrf.mxu0
  %v791 = vadd.f32 %v679, %v790
  %792 = vdwg.mxu0
  %793 = vmatprep.subr.mxu0 0.0
  %794 = vmatpush1.msra.mxu0 0.0
  %795 = vmatprep.subr.mxu0 0.0
  %796 = vmatpush1.msra.mxu0 0.0
  %797 = vmatprep.subr.mxu0 0.0
  %798 = vmatpush1.msra.mxu0 0.0
  %799 = vmatprep.subr.mxu0 0.0
  %800 = vmatpush1.msra.mxu0 0.0
  %801 = vmatprep.subr.mxu0 0.0
  %802 = vmatpush1.msra.mxu0 0.0
  %803 = vmatprep.subr.mxu0 0.0
  %804 = vmatpush1.msra.mxu0 0.0
  %805 = vmatprep.subr.mxu0 0.0
  %806 = vmatpush1.msra.mxu0 0.0
  %807 = vmatprep.subr.mxu0 0.0
  %808 = vmatpush1.msra.mxu0 0.0
  %809 = vmatprep.subr.mxu0 0.0
  %810 = vmatpush1.msra.mxu0 0.0
  %811 = vmatprep.subr.mxu0 0.0
  %812 = vmatpush1.msra.mxu0 0.0
  %813 = vmatprep.subr.mxu0 0.0
  %814 = vmatpush1.msra.mxu0 0.0
  %815 = vmatprep.subr.mxu0 0.0
  %816 = vmatpush1.msra.mxu0 0.0
  %v817 = vand.u32 %v45, 4294901760
  %v818 = vsub.f32 %v45, %v817
  %819 = vmatprep.subr.mxu0 %v818
  %v820 = vand.u32 %v44, 4294901760
  %v821 = vsub.f32 %v44, %v820
  %822 = vmatpush1.msra.mxu0 %v821
  %v823 = vand.u32 %v37, 4294901760
  %v824 = vsub.f32 %v37, %v823
  %825 = vmatprep.subr.mxu0 %v824
  %v826 = vand.u32 %v36, 4294901760
  %v827 = vsub.f32 %v36, %v826
  %828 = vmatpush1.msra.mxu0 %v827
  %v829 = vand.u32 %v29, 4294901760
  %v830 = vsub.f32 %v29, %v829
  %831 = vmatprep.subr.mxu0 %v830
  %v832 = vand.u32 %v28, 4294901760
  %v833 = vsub.f32 %v28, %v832
  %834 = vmatpush1.msra.mxu0 %v833
  %v835 = vand.u32 %v21, 4294901760
  %v836 = vsub.f32 %v21, %v835
  %837 = vmatprep.subr.mxu0 %v836
  %v838 = vand.u32 %v20, 4294901760
  %v839 = vsub.f32 %v20, %v838
  %840 = vmatpush1.msra.mxu0 %v839
  %841 = vmatprep.subr.mxu0 0.0
  %842 = vmatpush2.msra.mxu0 0.0
  %843 = vmatprep.subr.mxu0 0.0
  %844 = vmatpush2.msra.mxu0 0.0
  %845 = vmatprep.subr.mxu0 0.0
  %846 = vmatpush2.msra.mxu0 0.0
  %847 = vmatprep.subr.mxu0 0.0
  %848 = vmatpush2.msra.mxu0 0.0
  %849 = vmatprep.subr.mxu0 0.0
  %850 = vmatpush2.msra.mxu0 0.0
  %851 = vmatprep.subr.mxu0 0.0
  %852 = vmatpush2.msra.mxu0 0.0
  %853 = vmatprep.subr.mxu0 0.0
  %854 = vmatpush2.msra.mxu0 0.0
  %855 = vmatprep.subr.mxu0 0.0
  %856 = vmatpush2.msra.mxu0 0.0
  %857 = vmatprep.subr.mxu0 0.0
  %858 = vmatpush2.msra.mxu0 0.0
  %859 = vmatprep.subr.mxu0 0.0
  %860 = vmatpush2.msra.mxu0 0.0
  %861 = vmatprep.subr.mxu0 0.0
  %862 = vmatpush2.msra.mxu0 0.0
  %863 = vmatprep.subr.mxu0 0.0
  %864 = vmatpush2.msra.mxu0 0.0
  %865 = vmatprep.subr.mxu0 0.0
  %866 = vmatpush2.msra.mxu0 0.0
  %867 = vmatprep.subr.mxu0 0.0
  %868 = vmatpush2.msra.mxu0 0.0
  %869 = vmatprep.subr.mxu0 0.0
  %870 = vmatpush2.msra.mxu0 0.0
  %871 = vmatprep.subr.mxu0 0.0
  %872 = vmatpush2.msra.mxu0 0.0
  %873 = vmatprep.mubr.f32.mxu0 0.0
  %v874 = vand.u32 %v52, 4294901760
  %v875 = vsub.f32 %v52, %v874
  %876 = vmatmul.mubr.f32.gmra.mxu0 %v875
  %v877 = vpop.f32.mrf.mxu0
  %v878 = vadd.f32 %v789, %v877
  %v879 = vpop.f32.mrf.mxu0
  %v880 = vadd.f32 %v791, %v879
  %881 = vdwg.mxu0
  %882 = vmatprep.subr.mxu0 0.0
  %883 = vmatpush1.msra.mxu0 0.0
  %884 = vmatprep.subr.mxu0 0.0
  %885 = vmatpush1.msra.mxu0 0.0
  %886 = vmatprep.subr.mxu0 0.0
  %887 = vmatpush1.msra.mxu0 0.0
  %888 = vmatprep.subr.mxu0 0.0
  %889 = vmatpush1.msra.mxu0 0.0
  %890 = vmatprep.subr.mxu0 0.0
  %891 = vmatpush1.msra.mxu0 0.0
  %892 = vmatprep.subr.mxu0 0.0
  %893 = vmatpush1.msra.mxu0 0.0
  %894 = vmatprep.subr.mxu0 0.0
  %895 = vmatpush1.msra.mxu0 0.0
  %896 = vmatprep.subr.mxu0 0.0
  %897 = vmatpush1.msra.mxu0 0.0
  %898 = vmatprep.subr.mxu0 0.0
  %899 = vmatpush1.msra.mxu0 0.0
  %900 = vmatprep.subr.mxu0 0.0
  %901 = vmatpush1.msra.mxu0 0.0
  %902 = vmatprep.subr.mxu0 0.0
  %903 = vmatpush1.msra.mxu0 0.0
  %904 = vmatprep.subr.mxu0 0.0
  %905 = vmatpush1.msra.mxu0 0.0
  %v906 = vand.u32 %v45, 4294901760
  %907 = vmatprep.subr.mxu0 %v906
  %v908 = vand.u32 %v44, 4294901760
  %909 = vmatpush1.msra.mxu0 %v908
  %v910 = vand.u32 %v37, 4294901760
  %911 = vmatprep.subr.mxu0 %v910
  %v912 = vand.u32 %v36, 4294901760
  %913 = vmatpush1.msra.mxu0 %v912
  %v914 = vand.u32 %v29, 4294901760
  %915 = vmatprep.subr.mxu0 %v914
  %v916 = vand.u32 %v28, 4294901760
  %917 = vmatpush1.msra.mxu0 %v916
  %v918 = vand.u32 %v21, 4294901760
  %919 = vmatprep.subr.mxu0 %v918
  %v920 = vand.u32 %v20, 4294901760
  %921 = vmatpush1.msra.mxu0 %v920
  %922 = vmatprep.subr.mxu0 0.0
  %923 = vmatpush2.msra.mxu0 0.0
  %924 = vmatprep.subr.mxu0 0.0
  %925 = vmatpush2.msra.mxu0 0.0
  %926 = vmatprep.subr.mxu0 0.0
  %927 = vmatpush2.msra.mxu0 0.0
  %928 = vmatprep.subr.mxu0 0.0
  %929 = vmatpush2.msra.mxu0 0.0
  %930 = vmatprep.subr.mxu0 0.0
  %931 = vmatpush2.msra.mxu0 0.0
  %932 = vmatprep.subr.mxu0 0.0
  %933 = vmatpush2.msra.mxu0 0.0
  %934 = vmatprep.subr.mxu0 0.0
  %935 = vmatpush2.msra.mxu0 0.0
  %936 = vmatprep.subr.mxu0 0.0
  %937 = vmatpush2.msra.mxu0 0.0
  %938 = vmatprep.subr.mxu0 0.0
  %939 = vmatpush2.msra.mxu0 0.0
  %940 = vmatprep.subr.mxu0 0.0
  %941 = vmatpush2.msra.mxu0 0.0
  %942 = vmatprep.subr.mxu0 0.0
  %943 = vmatpush2.msra.mxu0 0.0
  %944 = vmatprep.subr.mxu0 0.0
  %945 = vmatpush2.msra.mxu0 0.0
  %946 = vmatprep.subr.mxu0 0.0
  %947 = vmatpush2.msra.mxu0 0.0
  %948 = vmatprep.subr.mxu0 0.0
  %949 = vmatpush2.msra.mxu0 0.0
  %950 = vmatprep.subr.mxu0 0.0
  %951 = vmatpush2.msra.mxu0 0.0
  %952 = vmatprep.subr.mxu0 0.0
  %953 = vmatpush2.msra.mxu0 0.0
  %954 = vmatprep.mubr.f32.mxu0 0.0
  %v955 = vand.u32 %v52, 4294901760
  %v956 = vsub.f32 %v52, %v955
  %v957 = vand.u32 %v956, 4294901760
  %958 = vmatmul.mubr.f32.gmra.mxu0 %v957
  %v959 = vpop.f32.mrf.mxu0
  %v960 = vadd.f32 %v878, %v959
  %v961 = vpop.f32.mrf.mxu0
  %v962 = vadd.f32 %v880, %v961
  %963 = vdwg.mxu0
  %964 = vmatprep.subr.mxu0 0.0
  %965 = vmatpush1.msra.mxu0 0.0
  %966 = vmatprep.subr.mxu0 0.0
  %967 = vmatpush1.msra.mxu0 0.0
  %968 = vmatprep.subr.mxu0 0.0
  %969 = vmatpush1.msra.mxu0 0.0
  %970 = vmatprep.subr.mxu0 0.0
  %971 = vmatpush1.msra.mxu0 0.0
  %972 = vmatprep.subr.mxu0 0.0
  %973 = vmatpush1.msra.mxu0 0.0
  %974 = vmatprep.subr.mxu0 0.0
  %975 = vmatpush1.msra.mxu0 0.0
  %976 = vmatprep.subr.mxu0 0.0
  %977 = vmatpush1.msra.mxu0 0.0
  %978 = vmatprep.subr.mxu0 0.0
  %979 = vmatpush1.msra.mxu0 0.0
  %980 = vmatprep.subr.mxu0 0.0
  %981 = vmatpush1.msra.mxu0 0.0
  %982 = vmatprep.subr.mxu0 0.0
  %983 = vmatpush1.msra.mxu0 0.0
  %984 = vmatprep.subr.mxu0 0.0
  %985 = vmatpush1.msra.mxu0 0.0
  %986 = vmatprep.subr.mxu0 0.0
  %987 = vmatpush1.msra.mxu0 0.0
  %v988 = vand.u32 %v45, 4294901760
  %v989 = vsub.f32 %v45, %v988
  %v990 = vand.u32 %v989, 4294901760
  %991 = vmatprep.subr.mxu0 %v990
  %v992 = vand.u32 %v44, 4294901760
  %v993 = vsub.f32 %v44, %v992
  %v994 = vand.u32 %v993, 4294901760
  %995 = vmatpush1.msra.mxu0 %v994
  %v996 = vand.u32 %v37, 4294901760
  %v997 = vsub.f32 %v37, %v996
  %v998 = vand.u32 %v997, 4294901760
  %999 = vmatprep.subr.mxu0 %v998
  %v1000 = vand.u32 %v36, 4294901760
  %v1001 = vsub.f32 %v36, %v1000
  %v1002 = vand.u32 %v1001, 4294901760
  %1003 = vmatpush1.msra.mxu0 %v1002
  %v1004 = vand.u32 %v29, 4294901760
  %v1005 = vsub.f32 %v29, %v1004
  %v1006 = vand.u32 %v1005, 4294901760
  %1007 = vmatprep.subr.mxu0 %v1006
  %v1008 = vand.u32 %v28, 4294901760
  %v1009 = vsub.f32 %v28, %v1008
  %v1010 = vand.u32 %v1009, 4294901760
  %1011 = vmatpush1.msra.mxu0 %v1010
  %v1012 = vand.u32 %v21, 4294901760
  %v1013 = vsub.f32 %v21, %v1012
  %v1014 = vand.u32 %v1013, 4294901760
  %1015 = vmatprep.subr.mxu0 %v1014
  %v1016 = vand.u32 %v20, 4294901760
  %v1017 = vsub.f32 %v20, %v1016
  %v1018 = vand.u32 %v1017, 4294901760
  %1019 = vmatpush1.msra.mxu0 %v1018
  %1020 = vmatprep.subr.mxu0 0.0
  %1021 = vmatpush2.msra.mxu0 0.0
  %1022 = vmatprep.subr.mxu0 0.0
  %1023 = vmatpush2.msra.mxu0 0.0
  %1024 = vmatprep.subr.mxu0 0.0
  %1025 = vmatpush2.msra.mxu0 0.0
  %1026 = vmatprep.subr.mxu0 0.0
  %1027 = vmatpush2.msra.mxu0 0.0
  %1028 = vmatprep.subr.mxu0 0.0
  %1029 = vmatpush2.msra.mxu0 0.0
  %1030 = vmatprep.subr.mxu0 0.0
  %1031 = vmatpush2.msra.mxu0 0.0
  %1032 = vmatprep.subr.mxu0 0.0
  %1033 = vmatpush2.msra.mxu0 0.0
  %1034 = vmatprep.subr.mxu0 0.0
  %1035 = vmatpush2.msra.mxu0 0.0
  %1036 = vmatprep.subr.mxu0 0.0
  %1037 = vmatpush2.msra.mxu0 0.0
  %1038 = vmatprep.subr.mxu0 0.0
  %1039 = vmatpush2.msra.mxu0 0.0
  %1040 = vmatprep.subr.mxu0 0.0
  %1041 = vmatpush2.msra.mxu0 0.0
  %1042 = vmatprep.subr.mxu0 0.0
  %1043 = vmatpush2.msra.mxu0 0.0
  %1044 = vmatprep.subr.mxu0 0.0
  %1045 = vmatpush2.msra.mxu0 0.0
  %1046 = vmatprep.subr.mxu0 0.0
  %1047 = vmatpush2.msra.mxu0 0.0
  %1048 = vmatprep.subr.mxu0 0.0
  %1049 = vmatpush2.msra.mxu0 0.0
  %1050 = vmatprep.subr.mxu0 0.0
  %1051 = vmatpush2.msra.mxu0 0.0
  %1052 = vmatprep.mubr.f32.mxu0 0.0
  %v1053 = vand.u32 %v52, 4294901760
  %1054 = vmatmul.mubr.f32.gmra.mxu0 %v1053
  %v1055 = vpop.f32.mrf.mxu0
  %v1056 = vadd.f32 %v960, %v1055
  %v1057 = vpop.f32.mrf.mxu0
  %v1058 = vadd.f32 %v962, %v1057
  %1059 = vdwg.mxu0
  %1060 = vmatprep.subr.mxu0 0.0
  %1061 = vmatpush1.msra.mxu0 0.0
  %1062 = vmatprep.subr.mxu0 0.0
  %1063 = vmatpush1.msra.mxu0 0.0
  %1064 = vmatprep.subr.mxu0 0.0
  %1065 = vmatpush1.msra.mxu0 0.0
  %1066 = vmatprep.subr.mxu0 0.0
  %1067 = vmatpush1.msra.mxu0 0.0
  %1068 = vmatprep.subr.mxu0 0.0
  %1069 = vmatpush1.msra.mxu0 0.0
  %1070 = vmatprep.subr.mxu0 0.0
  %1071 = vmatpush1.msra.mxu0 0.0
  %1072 = vmatprep.subr.mxu0 0.0
  %1073 = vmatpush1.msra.mxu0 0.0
  %1074 = vmatprep.subr.mxu0 0.0
  %1075 = vmatpush1.msra.mxu0 0.0
  %1076 = vmatprep.subr.mxu0 0.0
  %1077 = vmatpush1.msra.mxu0 0.0
  %1078 = vmatprep.subr.mxu0 0.0
  %1079 = vmatpush1.msra.mxu0 0.0
  %1080 = vmatprep.subr.mxu0 0.0
  %1081 = vmatpush1.msra.mxu0 0.0
  %1082 = vmatprep.subr.mxu0 0.0
  %1083 = vmatpush1.msra.mxu0 0.0
  %v1084 = vand.u32 %v45, 4294901760
  %1085 = vmatprep.subr.mxu0 %v1084
  %v1086 = vand.u32 %v44, 4294901760
  %1087 = vmatpush1.msra.mxu0 %v1086
  %v1088 = vand.u32 %v37, 4294901760
  %1089 = vmatprep.subr.mxu0 %v1088
  %v1090 = vand.u32 %v36, 4294901760
  %1091 = vmatpush1.msra.mxu0 %v1090
  %v1092 = vand.u32 %v29, 4294901760
  %1093 = vmatprep.subr.mxu0 %v1092
  %v1094 = vand.u32 %v28, 4294901760
  %1095 = vmatpush1.msra.mxu0 %v1094
  %v1096 = vand.u32 %v21, 4294901760
  %1097 = vmatprep.subr.mxu0 %v1096
  %v1098 = vand.u32 %v20, 4294901760
  %1099 = vmatpush1.msra.mxu0 %v1098
  %1100 = vmatprep.subr.mxu0 0.0
  %1101 = vmatpush2.msra.mxu0 0.0
  %1102 = vmatprep.subr.mxu0 0.0
  %1103 = vmatpush2.msra.mxu0 0.0
  %1104 = vmatprep.subr.mxu0 0.0
  %1105 = vmatpush2.msra.mxu0 0.0
  %1106 = vmatprep.subr.mxu0 0.0
  %1107 = vmatpush2.msra.mxu0 0.0
  %1108 = vmatprep.subr.mxu0 0.0
  %1109 = vmatpush2.msra.mxu0 0.0
  %1110 = vmatprep.subr.mxu0 0.0
  %1111 = vmatpush2.msra.mxu0 0.0
  %1112 = vmatprep.subr.mxu0 0.0
  %1113 = vmatpush2.msra.mxu0 0.0
  %1114 = vmatprep.subr.mxu0 0.0
  %1115 = vmatpush2.msra.mxu0 0.0
  %1116 = vmatprep.subr.mxu0 0.0
  %1117 = vmatpush2.msra.mxu0 0.0
  %1118 = vmatprep.subr.mxu0 0.0
  %1119 = vmatpush2.msra.mxu0 0.0
  %1120 = vmatprep.subr.mxu0 0.0
  %1121 = vmatpush2.msra.mxu0 0.0
  %1122 = vmatprep.subr.mxu0 0.0
  %1123 = vmatpush2.msra.mxu0 0.0
  %1124 = vmatprep.subr.mxu0 0.0
  %1125 = vmatpush2.msra.mxu0 0.0
  %1126 = vmatprep.subr.mxu0 0.0
  %1127 = vmatpush2.msra.mxu0 0.0
  %1128 = vmatprep.subr.mxu0 0.0
  %1129 = vmatpush2.msra.mxu0 0.0
  %1130 = vmatprep.subr.mxu0 0.0
  %1131 = vmatpush2.msra.mxu0 0.0
  %1132 = vmatprep.mubr.f32.mxu0 0.0
  %v1133 = vand.u32 %v52, 4294901760
  %1134 = vmatmul.mubr.f32.gmra.mxu0 %v1133
  %v1135 = vpop.f32.mrf.mxu0
  %v1136 = vadd.f32 %v1056, %v1135
  %v1137 = vpop.f32.mrf.mxu0
  %v1138 = vadd.f32 %v1058, %v1137
  %1139 = vdwg.mxu0
  %1140 = vmatprep.subr.mxu0 0.0
  %1141 = vmatpush1.msra.mxu0 0.0
  %1142 = vmatprep.subr.mxu0 0.0
  %1143 = vmatpush1.msra.mxu0 0.0
  %1144 = vmatprep.subr.mxu0 0.0
  %1145 = vmatpush1.msra.mxu0 0.0
  %1146 = vmatprep.subr.mxu0 0.0
  %1147 = vmatpush1.msra.mxu0 0.0
  %1148 = vmatprep.subr.mxu0 0.0
  %1149 = vmatpush1.msra.mxu0 0.0
  %1150 = vmatprep.subr.mxu0 0.0
  %1151 = vmatpush1.msra.mxu0 0.0
  %1152 = vmatprep.subr.mxu0 0.0
  %1153 = vmatpush1.msra.mxu0 0.0
  %1154 = vmatprep.subr.mxu0 0.0
  %1155 = vmatpush1.msra.mxu0 0.0
  %1156 = vmatprep.subr.mxu0 0.0
  %1157 = vmatpush1.msra.mxu0 0.0
  %1158 = vmatprep.subr.mxu0 0.0
  %1159 = vmatpush1.msra.mxu0 0.0
  %1160 = vmatprep.subr.mxu0 0.0
  %1161 = vmatpush1.msra.mxu0 0.0
  %1162 = vmatprep.subr.mxu0 0.0
  %1163 = vmatpush1.msra.mxu0 0.0
  %v1164 = vand.u32 %v47, 4294901760
  %1165 = vmatprep.subr.mxu0 %v1164
  %v1166 = vand.u32 %v46, 4294901760
  %1167 = vmatpush1.msra.mxu0 %v1166
  %v1168 = vand.u32 %v39, 4294901760
  %1169 = vmatprep.subr.mxu0 %v1168
  %v1170 = vand.u32 %v38, 4294901760
  %1171 = vmatpush1.msra.mxu0 %v1170
  %v1172 = vand.u32 %v31, 4294901760
  %1173 = vmatprep.subr.mxu0 %v1172
  %v1174 = vand.u32 %v30, 4294901760
  %1175 = vmatpush1.msra.mxu0 %v1174
  %v1176 = vand.u32 %v23, 4294901760
  %1177 = vmatprep.subr.mxu0 %v1176
  %v1178 = vand.u32 %v22, 4294901760
  %1179 = vmatpush1.msra.mxu0 %v1178
  %1180 = vmatprep.subr.mxu0 0.0
  %1181 = vmatpush2.msra.mxu0 0.0
  %1182 = vmatprep.subr.mxu0 0.0
  %1183 = vmatpush2.msra.mxu0 0.0
  %1184 = vmatprep.subr.mxu0 0.0
  %1185 = vmatpush2.msra.mxu0 0.0
  %1186 = vmatprep.subr.mxu0 0.0
  %1187 = vmatpush2.msra.mxu0 0.0
  %1188 = vmatprep.subr.mxu0 0.0
  %1189 = vmatpush2.msra.mxu0 0.0
  %1190 = vmatprep.subr.mxu0 0.0
  %1191 = vmatpush2.msra.mxu0 0.0
  %1192 = vmatprep.subr.mxu0 0.0
  %1193 = vmatpush2.msra.mxu0 0.0
  %1194 = vmatprep.subr.mxu0 0.0
  %1195 = vmatpush2.msra.mxu0 0.0
  %1196 = vmatprep.subr.mxu0 0.0
  %1197 = vmatpush2.msra.mxu0 0.0
  %1198 = vmatprep.subr.mxu0 0.0
  %1199 = vmatpush2.msra.mxu0 0.0
  %1200 = vmatprep.subr.mxu0 0.0
  %1201 = vmatpush2.msra.mxu0 0.0
  %1202 = vmatprep.subr.mxu0 0.0
  %1203 = vmatpush2.msra.mxu0 0.0
  %1204 = vmatprep.subr.mxu0 0.0
  %1205 = vmatpush2.msra.mxu0 0.0
  %1206 = vmatprep.subr.mxu0 0.0
  %1207 = vmatpush2.msra.mxu0 0.0
  %1208 = vmatprep.subr.mxu0 0.0
  %1209 = vmatpush2.msra.mxu0 0.0
  %1210 = vmatprep.subr.mxu0 0.0
  %1211 = vmatpush2.msra.mxu0 0.0
  %1212 = vmatprep.mubr.f32.mxu0 0.0
  %v1213 = vand.u32 %v52, 4294901760
  %v1214 = vsub.f32 %v52, %v1213
  %v1215 = vand.u32 %v1214, 4294901760
  %v1216 = vsub.f32 %v1214, %v1215
  %v1217 = vand.u32 %v1216, 4294901760
  %1218 = vmatmul.mubr.f32.gmra.mxu0 %v1217
  %v1219 = vpop.f32.mrf.mxu0
  %v1220 = vadd.f32 0.0, %v1219
  %v1221 = vpop.f32.mrf.mxu0
  %v1222 = vadd.f32 0.0, %v1221
  %1223 = vdwg.mxu0
  %1224 = vmatprep.subr.mxu0 0.0
  %1225 = vmatpush1.msra.mxu0 0.0
  %1226 = vmatprep.subr.mxu0 0.0
  %1227 = vmatpush1.msra.mxu0 0.0
  %1228 = vmatprep.subr.mxu0 0.0
  %1229 = vmatpush1.msra.mxu0 0.0
  %1230 = vmatprep.subr.mxu0 0.0
  %1231 = vmatpush1.msra.mxu0 0.0
  %1232 = vmatprep.subr.mxu0 0.0
  %1233 = vmatpush1.msra.mxu0 0.0
  %1234 = vmatprep.subr.mxu0 0.0
  %1235 = vmatpush1.msra.mxu0 0.0
  %1236 = vmatprep.subr.mxu0 0.0
  %1237 = vmatpush1.msra.mxu0 0.0
  %1238 = vmatprep.subr.mxu0 0.0
  %1239 = vmatpush1.msra.mxu0 0.0
  %1240 = vmatprep.subr.mxu0 0.0
  %1241 = vmatpush1.msra.mxu0 0.0
  %1242 = vmatprep.subr.mxu0 0.0
  %1243 = vmatpush1.msra.mxu0 0.0
  %1244 = vmatprep.subr.mxu0 0.0
  %1245 = vmatpush1.msra.mxu0 0.0
  %1246 = vmatprep.subr.mxu0 0.0
  %1247 = vmatpush1.msra.mxu0 0.0
  %v1248 = vand.u32 %v47, 4294901760
  %v1249 = vsub.f32 %v47, %v1248
  %v1250 = vand.u32 %v1249, 4294901760
  %v1251 = vsub.f32 %v1249, %v1250
  %v1252 = vand.u32 %v1251, 4294901760
  %1253 = vmatprep.subr.mxu0 %v1252
  %v1254 = vand.u32 %v46, 4294901760
  %v1255 = vsub.f32 %v46, %v1254
  %v1256 = vand.u32 %v1255, 4294901760
  %v1257 = vsub.f32 %v1255, %v1256
  %v1258 = vand.u32 %v1257, 4294901760
  %1259 = vmatpush1.msra.mxu0 %v1258
  %v1260 = vand.u32 %v39, 4294901760
  %v1261 = vsub.f32 %v39, %v1260
  %v1262 = vand.u32 %v1261, 4294901760
  %v1263 = vsub.f32 %v1261, %v1262
  %v1264 = vand.u32 %v1263, 4294901760
  %1265 = vmatprep.subr.mxu0 %v1264
  %v1266 = vand.u32 %v38, 4294901760
  %v1267 = vsub.f32 %v38, %v1266
  %v1268 = vand.u32 %v1267, 4294901760
  %v1269 = vsub.f32 %v1267, %v1268
  %v1270 = vand.u32 %v1269, 4294901760
  %1271 = vmatpush1.msra.mxu0 %v1270
  %v1272 = vand.u32 %v31, 4294901760
  %v1273 = vsub.f32 %v31, %v1272
  %v1274 = vand.u32 %v1273, 4294901760
  %v1275 = vsub.f32 %v1273, %v1274
  %v1276 = vand.u32 %v1275, 4294901760
  %1277 = vmatprep.subr.mxu0 %v1276
  %v1278 = vand.u32 %v30, 4294901760
  %v1279 = vsub.f32 %v30, %v1278
  %v1280 = vand.u32 %v1279, 4294901760
  %v1281 = vsub.f32 %v1279, %v1280
  %v1282 = vand.u32 %v1281, 4294901760
  %1283 = vmatpush1.msra.mxu0 %v1282
  %v1284 = vand.u32 %v23, 4294901760
  %v1285 = vsub.f32 %v23, %v1284
  %v1286 = vand.u32 %v1285, 4294901760
  %v1287 = vsub.f32 %v1285, %v1286
  %v1288 = vand.u32 %v1287, 4294901760
  %1289 = vmatprep.subr.mxu0 %v1288
  %v1290 = vand.u32 %v22, 4294901760
  %v1291 = vsub.f32 %v22, %v1290
  %v1292 = vand.u32 %v1291, 4294901760
  %v1293 = vsub.f32 %v1291, %v1292
  %v1294 = vand.u32 %v1293, 4294901760
  %1295 = vmatpush1.msra.mxu0 %v1294
  %1296 = vmatprep.subr.mxu0 0.0
  %1297 = vmatpush2.msra.mxu0 0.0
  %1298 = vmatprep.subr.mxu0 0.0
  %1299 = vmatpush2.msra.mxu0 0.0
  %1300 = vmatprep.subr.mxu0 0.0
  %1301 = vmatpush2.msra.mxu0 0.0
  %1302 = vmatprep.subr.mxu0 0.0
  %1303 = vmatpush2.msra.mxu0 0.0
  %1304 = vmatprep.subr.mxu0 0.0
  %1305 = vmatpush2.msra.mxu0 0.0
  %1306 = vmatprep.subr.mxu0 0.0
  %1307 = vmatpush2.msra.mxu0 0.0
  %1308 = vmatprep.subr.mxu0 0.0
  %1309 = vmatpush2.msra.mxu0 0.0
  %1310 = vmatprep.subr.mxu0 0.0
  %1311 = vmatpush2.msra.mxu0 0.0
  %1312 = vmatprep.subr.mxu0 0.0
  %1313 = vmatpush2.msra.mxu0 0.0
  %1314 = vmatprep.subr.mxu0 0.0
  %1315 = vmatpush2.msra.mxu0 0.0
  %1316 = vmatprep.subr.mxu0 0.0
  %1317 = vmatpush2.msra.mxu0 0.0
  %1318 = vmatprep.subr.mxu0 0.0
  %1319 = vmatpush2.msra.mxu0 0.0
  %1320 = vmatprep.subr.mxu0 0.0
  %1321 = vmatpush2.msra.mxu0 0.0
  %1322 = vmatprep.subr.mxu0 0.0
  %1323 = vmatpush2.msra.mxu0 0.0
  %1324 = vmatprep.subr.mxu0 0.0
  %1325 = vmatpush2.msra.mxu0 0.0
  %1326 = vmatprep.subr.mxu0 0.0
  %1327 = vmatpush2.msra.mxu0 0.0
  %1328 = vmatprep.mubr.f32.mxu0 0.0
  %v1329 = vand.u32 %v52, 4294901760
  %1330 = vmatmul.mubr.f32.gmra.mxu0 %v1329
  %v1331 = vpop.f32.mrf.mxu0
  %v1332 = vadd.f32 %v1220, %v1331
  %v1333 = vpop.f32.mrf.mxu0
  %v1334 = vadd.f32 %v1222, %v1333
  %1335 = vdwg.mxu0
  %1336 = vmatprep.subr.mxu0 0.0
  %1337 = vmatpush1.msra.mxu0 0.0
  %1338 = vmatprep.subr.mxu0 0.0
  %1339 = vmatpush1.msra.mxu0 0.0
  %1340 = vmatprep.subr.mxu0 0.0
  %1341 = vmatpush1.msra.mxu0 0.0
  %1342 = vmatprep.subr.mxu0 0.0
  %1343 = vmatpush1.msra.mxu0 0.0
  %1344 = vmatprep.subr.mxu0 0.0
  %1345 = vmatpush1.msra.mxu0 0.0
  %1346 = vmatprep.subr.mxu0 0.0
  %1347 = vmatpush1.msra.mxu0 0.0
  %1348 = vmatprep.subr.mxu0 0.0
  %1349 = vmatpush1.msra.mxu0 0.0
  %1350 = vmatprep.subr.mxu0 0.0
  %1351 = vmatpush1.msra.mxu0 0.0
  %1352 = vmatprep.subr.mxu0 0.0
  %1353 = vmatpush1.msra.mxu0 0.0
  %1354 = vmatprep.subr.mxu0 0.0
  %1355 = vmatpush1.msra.mxu0 0.0
  %1356 = vmatprep.subr.mxu0 0.0
  %1357 = vmatpush1.msra.mxu0 0.0
  %1358 = vmatprep.subr.mxu0 0.0
  %1359 = vmatpush1.msra.mxu0 0.0
  %v1360 = vand.u32 %v47, 4294901760
  %v1361 = vsub.f32 %v47, %v1360
  %1362 = vmatprep.subr.mxu0 %v1361
  %v1363 = vand.u32 %v46, 4294901760
  %v1364 = vsub.f32 %v46, %v1363
  %1365 = vmatpush1.msra.mxu0 %v1364
  %v1366 = vand.u32 %v39, 4294901760
  %v1367 = vsub.f32 %v39, %v1366
  %1368 = vmatprep.subr.mxu0 %v1367
  %v1369 = vand.u32 %v38, 4294901760
  %v1370 = vsub.f32 %v38, %v1369
  %1371 = vmatpush1.msra.mxu0 %v1370
  %v1372 = vand.u32 %v31, 4294901760
  %v1373 = vsub.f32 %v31, %v1372
  %1374 = vmatprep.subr.mxu0 %v1373
  %v1375 = vand.u32 %v30, 4294901760
  %v1376 = vsub.f32 %v30, %v1375
  %1377 = vmatpush1.msra.mxu0 %v1376
  %v1378 = vand.u32 %v23, 4294901760
  %v1379 = vsub.f32 %v23, %v1378
  %1380 = vmatprep.subr.mxu0 %v1379
  %v1381 = vand.u32 %v22, 4294901760
  %v1382 = vsub.f32 %v22, %v1381
  %1383 = vmatpush1.msra.mxu0 %v1382
  %1384 = vmatprep.subr.mxu0 0.0
  %1385 = vmatpush2.msra.mxu0 0.0
  %1386 = vmatprep.subr.mxu0 0.0
  %1387 = vmatpush2.msra.mxu0 0.0
  %1388 = vmatprep.subr.mxu0 0.0
  %1389 = vmatpush2.msra.mxu0 0.0
  %1390 = vmatprep.subr.mxu0 0.0
  %1391 = vmatpush2.msra.mxu0 0.0
  %1392 = vmatprep.subr.mxu0 0.0
  %1393 = vmatpush2.msra.mxu0 0.0
  %1394 = vmatprep.subr.mxu0 0.0
  %1395 = vmatpush2.msra.mxu0 0.0
  %1396 = vmatprep.subr.mxu0 0.0
  %1397 = vmatpush2.msra.mxu0 0.0
  %1398 = vmatprep.subr.mxu0 0.0
  %1399 = vmatpush2.msra.mxu0 0.0
  %1400 = vmatprep.subr.mxu0 0.0
  %1401 = vmatpush2.msra.mxu0 0.0
  %1402 = vmatprep.subr.mxu0 0.0
  %1403 = vmatpush2.msra.mxu0 0.0
  %1404 = vmatprep.subr.mxu0 0.0
  %1405 = vmatpush2.msra.mxu0 0.0
  %1406 = vmatprep.subr.mxu0 0.0
  %1407 = vmatpush2.msra.mxu0 0.0
  %1408 = vmatprep.subr.mxu0 0.0
  %1409 = vmatpush2.msra.mxu0 0.0
  %1410 = vmatprep.subr.mxu0 0.0
  %1411 = vmatpush2.msra.mxu0 0.0
  %1412 = vmatprep.subr.mxu0 0.0
  %1413 = vmatpush2.msra.mxu0 0.0
  %1414 = vmatprep.subr.mxu0 0.0
  %1415 = vmatpush2.msra.mxu0 0.0
  %1416 = vmatprep.mubr.f32.mxu0 0.0
  %v1417 = vand.u32 %v52, 4294901760
  %v1418 = vsub.f32 %v52, %v1417
  %1419 = vmatmul.mubr.f32.gmra.mxu0 %v1418
  %v1420 = vpop.f32.mrf.mxu0
  %v1421 = vadd.f32 %v1332, %v1420
  %v1422 = vpop.f32.mrf.mxu0
  %v1423 = vadd.f32 %v1334, %v1422
  %1424 = vdwg.mxu0
  %1425 = vmatprep.subr.mxu0 0.0
  %1426 = vmatpush1.msra.mxu0 0.0
  %1427 = vmatprep.subr.mxu0 0.0
  %1428 = vmatpush1.msra.mxu0 0.0
  %1429 = vmatprep.subr.mxu0 0.0
  %1430 = vmatpush1.msra.mxu0 0.0
  %1431 = vmatprep.subr.mxu0 0.0
  %1432 = vmatpush1.msra.mxu0 0.0
  %1433 = vmatprep.subr.mxu0 0.0
  %1434 = vmatpush1.msra.mxu0 0.0
  %1435 = vmatprep.subr.mxu0 0.0
  %1436 = vmatpush1.msra.mxu0 0.0
  %1437 = vmatprep.subr.mxu0 0.0
  %1438 = vmatpush1.msra.mxu0 0.0
  %1439 = vmatprep.subr.mxu0 0.0
  %1440 = vmatpush1.msra.mxu0 0.0
  %1441 = vmatprep.subr.mxu0 0.0
  %1442 = vmatpush1.msra.mxu0 0.0
  %1443 = vmatprep.subr.mxu0 0.0
  %1444 = vmatpush1.msra.mxu0 0.0
  %1445 = vmatprep.subr.mxu0 0.0
  %1446 = vmatpush1.msra.mxu0 0.0
  %1447 = vmatprep.subr.mxu0 0.0
  %1448 = vmatpush1.msra.mxu0 0.0
  %v1449 = vand.u32 %v47, 4294901760
  %1450 = vmatprep.subr.mxu0 %v1449
  %v1451 = vand.u32 %v46, 4294901760
  %1452 = vmatpush1.msra.mxu0 %v1451
  %v1453 = vand.u32 %v39, 4294901760
  %1454 = vmatprep.subr.mxu0 %v1453
  %v1455 = vand.u32 %v38, 4294901760
  %1456 = vmatpush1.msra.mxu0 %v1455
  %v1457 = vand.u32 %v31, 4294901760
  %1458 = vmatprep.subr.mxu0 %v1457
  %v1459 = vand.u32 %v30, 4294901760
  %1460 = vmatpush1.msra.mxu0 %v1459
  %v1461 = vand.u32 %v23, 4294901760
  %1462 = vmatprep.subr.mxu0 %v1461
  %v1463 = vand.u32 %v22, 4294901760
  %1464 = vmatpush1.msra.mxu0 %v1463
  %1465 = vmatprep.subr.mxu0 0.0
  %1466 = vmatpush2.msra.mxu0 0.0
  %1467 = vmatprep.subr.mxu0 0.0
  %1468 = vmatpush2.msra.mxu0 0.0
  %1469 = vmatprep.subr.mxu0 0.0
  %1470 = vmatpush2.msra.mxu0 0.0
  %1471 = vmatprep.subr.mxu0 0.0
  %1472 = vmatpush2.msra.mxu0 0.0
  %1473 = vmatprep.subr.mxu0 0.0
  %1474 = vmatpush2.msra.mxu0 0.0
  %1475 = vmatprep.subr.mxu0 0.0
  %1476 = vmatpush2.msra.mxu0 0.0
  %1477 = vmatprep.subr.mxu0 0.0
  %1478 = vmatpush2.msra.mxu0 0.0
  %1479 = vmatprep.subr.mxu0 0.0
  %1480 = vmatpush2.msra.mxu0 0.0
  %1481 = vmatprep.subr.mxu0 0.0
  %1482 = vmatpush2.msra.mxu0 0.0
  %1483 = vmatprep.subr.mxu0 0.0
  %1484 = vmatpush2.msra.mxu0 0.0
  %1485 = vmatprep.subr.mxu0 0.0
  %1486 = vmatpush2.msra.mxu0 0.0
  %1487 = vmatprep.subr.mxu0 0.0
  %1488 = vmatpush2.msra.mxu0 0.0
  %1489 = vmatprep.subr.mxu0 0.0
  %1490 = vmatpush2.msra.mxu0 0.0
  %1491 = vmatprep.subr.mxu0 0.0
  %1492 = vmatpush2.msra.mxu0 0.0
  %1493 = vmatprep.subr.mxu0 0.0
  %1494 = vmatpush2.msra.mxu0 0.0
  %1495 = vmatprep.subr.mxu0 0.0
  %1496 = vmatpush2.msra.mxu0 0.0
  %1497 = vmatprep.mubr.f32.mxu0 0.0
  %v1498 = vand.u32 %v52, 4294901760
  %v1499 = vsub.f32 %v52, %v1498
  %v1500 = vand.u32 %v1499, 4294901760
  %1501 = vmatmul.mubr.f32.gmra.mxu0 %v1500
  %v1502 = vpop.f32.mrf.mxu0
  %v1503 = vadd.f32 %v1421, %v1502
  %v1504 = vpop.f32.mrf.mxu0
  %v1505 = vadd.f32 %v1423, %v1504
  %1506 = vdwg.mxu0
  %1507 = vmatprep.subr.mxu0 0.0
  %1508 = vmatpush1.msra.mxu0 0.0
  %1509 = vmatprep.subr.mxu0 0.0
  %1510 = vmatpush1.msra.mxu0 0.0
  %1511 = vmatprep.subr.mxu0 0.0
  %1512 = vmatpush1.msra.mxu0 0.0
  %1513 = vmatprep.subr.mxu0 0.0
  %1514 = vmatpush1.msra.mxu0 0.0
  %1515 = vmatprep.subr.mxu0 0.0
  %1516 = vmatpush1.msra.mxu0 0.0
  %1517 = vmatprep.subr.mxu0 0.0
  %1518 = vmatpush1.msra.mxu0 0.0
  %1519 = vmatprep.subr.mxu0 0.0
  %1520 = vmatpush1.msra.mxu0 0.0
  %1521 = vmatprep.subr.mxu0 0.0
  %1522 = vmatpush1.msra.mxu0 0.0
  %1523 = vmatprep.subr.mxu0 0.0
  %1524 = vmatpush1.msra.mxu0 0.0
  %1525 = vmatprep.subr.mxu0 0.0
  %1526 = vmatpush1.msra.mxu0 0.0
  %1527 = vmatprep.subr.mxu0 0.0
  %1528 = vmatpush1.msra.mxu0 0.0
  %1529 = vmatprep.subr.mxu0 0.0
  %1530 = vmatpush1.msra.mxu0 0.0
  %v1531 = vand.u32 %v47, 4294901760
  %v1532 = vsub.f32 %v47, %v1531
  %v1533 = vand.u32 %v1532, 4294901760
  %1534 = vmatprep.subr.mxu0 %v1533
  %v1535 = vand.u32 %v46, 4294901760
  %v1536 = vsub.f32 %v46, %v1535
  %v1537 = vand.u32 %v1536, 4294901760
  %1538 = vmatpush1.msra.mxu0 %v1537
  %v1539 = vand.u32 %v39, 4294901760
  %v1540 = vsub.f32 %v39, %v1539
  %v1541 = vand.u32 %v1540, 4294901760
  %1542 = vmatprep.subr.mxu0 %v1541
  %v1543 = vand.u32 %v38, 4294901760
  %v1544 = vsub.f32 %v38, %v1543
  %v1545 = vand.u32 %v1544, 4294901760
  %1546 = vmatpush1.msra.mxu0 %v1545
  %v1547 = vand.u32 %v31, 4294901760
  %v1548 = vsub.f32 %v31, %v1547
  %v1549 = vand.u32 %v1548, 4294901760
  %1550 = vmatprep.subr.mxu0 %v1549
  %v1551 = vand.u32 %v30, 4294901760
  %v1552 = vsub.f32 %v30, %v1551
  %v1553 = vand.u32 %v1552, 4294901760
  %1554 = vmatpush1.msra.mxu0 %v1553
  %v1555 = vand.u32 %v23, 4294901760
  %v1556 = vsub.f32 %v23, %v1555
  %v1557 = vand.u32 %v1556, 4294901760
  %1558 = vmatprep.subr.mxu0 %v1557
  %v1559 = vand.u32 %v22, 4294901760
  %v1560 = vsub.f32 %v22, %v1559
  %v1561 = vand.u32 %v1560, 4294901760
  %1562 = vmatpush1.msra.mxu0 %v1561
  %1563 = vmatprep.subr.mxu0 0.0
  %1564 = vmatpush2.msra.mxu0 0.0
  %1565 = vmatprep.subr.mxu0 0.0
  %1566 = vmatpush2.msra.mxu0 0.0
  %1567 = vmatprep.subr.mxu0 0.0
  %1568 = vmatpush2.msra.mxu0 0.0
  %1569 = vmatprep.subr.mxu0 0.0
  %1570 = vmatpush2.msra.mxu0 0.0
  %1571 = vmatprep.subr.mxu0 0.0
  %1572 = vmatpush2.msra.mxu0 0.0
  %1573 = vmatprep.subr.mxu0 0.0
  %1574 = vmatpush2.msra.mxu0 0.0
  %1575 = vmatprep.subr.mxu0 0.0
  %1576 = vmatpush2.msra.mxu0 0.0
  %1577 = vmatprep.subr.mxu0 0.0
  %1578 = vmatpush2.msra.mxu0 0.0
  %1579 = vmatprep.subr.mxu0 0.0
  %1580 = vmatpush2.msra.mxu0 0.0
  %1581 = vmatprep.subr.mxu0 0.0
  %1582 = vmatpush2.msra.mxu0 0.0
  %1583 = vmatprep.subr.mxu0 0.0
  %1584 = vmatpush2.msra.mxu0 0.0
  %1585 = vmatprep.subr.mxu0 0.0
  %1586 = vmatpush2.msra.mxu0 0.0
  %1587 = vmatprep.subr.mxu0 0.0
  %1588 = vmatpush2.msra.mxu0 0.0
  %1589 = vmatprep.subr.mxu0 0.0
  %1590 = vmatpush2.msra.mxu0 0.0
  %1591 = vmatprep.subr.mxu0 0.0
  %1592 = vmatpush2.msra.mxu0 0.0
  %1593 = vmatprep.subr.mxu0 0.0
  %1594 = vmatpush2.msra.mxu0 0.0
  %1595 = vmatprep.mubr.f32.mxu0 0.0
  %v1596 = vand.u32 %v52, 4294901760
  %1597 = vmatmul.mubr.f32.gmra.mxu0 %v1596
  %v1598 = vpop.f32.mrf.mxu0
  %v1599 = vadd.f32 %v1503, %v1598
  %v1600 = vpop.f32.mrf.mxu0
  %v1601 = vadd.f32 %v1505, %v1600
  %1602 = vdwg.mxu0
  %1603 = vmatprep.subr.mxu0 0.0
  %1604 = vmatpush1.msra.mxu0 0.0
  %1605 = vmatprep.subr.mxu0 0.0
  %1606 = vmatpush1.msra.mxu0 0.0
  %1607 = vmatprep.subr.mxu0 0.0
  %1608 = vmatpush1.msra.mxu0 0.0
  %1609 = vmatprep.subr.mxu0 0.0
  %1610 = vmatpush1.msra.mxu0 0.0
  %1611 = vmatprep.subr.mxu0 0.0
  %1612 = vmatpush1.msra.mxu0 0.0
  %1613 = vmatprep.subr.mxu0 0.0
  %1614 = vmatpush1.msra.mxu0 0.0
  %1615 = vmatprep.subr.mxu0 0.0
  %1616 = vmatpush1.msra.mxu0 0.0
  %1617 = vmatprep.subr.mxu0 0.0
  %1618 = vmatpush1.msra.mxu0 0.0
  %1619 = vmatprep.subr.mxu0 0.0
  %1620 = vmatpush1.msra.mxu0 0.0
  %1621 = vmatprep.subr.mxu0 0.0
  %1622 = vmatpush1.msra.mxu0 0.0
  %1623 = vmatprep.subr.mxu0 0.0
  %1624 = vmatpush1.msra.mxu0 0.0
  %1625 = vmatprep.subr.mxu0 0.0
  %1626 = vmatpush1.msra.mxu0 0.0
  %v1627 = vand.u32 %v47, 4294901760
  %1628 = vmatprep.subr.mxu0 %v1627
  %v1629 = vand.u32 %v46, 4294901760
  %1630 = vmatpush1.msra.mxu0 %v1629
  %v1631 = vand.u32 %v39, 4294901760
  %1632 = vmatprep.subr.mxu0 %v1631
  %v1633 = vand.u32 %v38, 4294901760
  %1634 = vmatpush1.msra.mxu0 %v1633
  %v1635 = vand.u32 %v31, 4294901760
  %1636 = vmatprep.subr.mxu0 %v1635
  %v1637 = vand.u32 %v30, 4294901760
  %1638 = vmatpush1.msra.mxu0 %v1637
  %v1639 = vand.u32 %v23, 4294901760
  %1640 = vmatprep.subr.mxu0 %v1639
  %v1641 = vand.u32 %v22, 4294901760
  %1642 = vmatpush1.msra.mxu0 %v1641
  %1643 = vmatprep.subr.mxu0 0.0
  %1644 = vmatpush2.msra.mxu0 0.0
  %1645 = vmatprep.subr.mxu0 0.0
  %1646 = vmatpush2.msra.mxu0 0.0
  %1647 = vmatprep.subr.mxu0 0.0
  %1648 = vmatpush2.msra.mxu0 0.0
  %1649 = vmatprep.subr.mxu0 0.0
  %1650 = vmatpush2.msra.mxu0 0.0
  %1651 = vmatprep.subr.mxu0 0.0
  %1652 = vmatpush2.msra.mxu0 0.0
  %1653 = vmatprep.subr.mxu0 0.0
  %1654 = vmatpush2.msra.mxu0 0.0
  %1655 = vmatprep.subr.mxu0 0.0
  %1656 = vmatpush2.msra.mxu0 0.0
  %1657 = vmatprep.subr.mxu0 0.0
  %1658 = vmatpush2.msra.mxu0 0.0
  %1659 = vmatprep.subr.mxu0 0.0
  %1660 = vmatpush2.msra.mxu0 0.0
  %1661 = vmatprep.subr.mxu0 0.0
  %1662 = vmatpush2.msra.mxu0 0.0
  %1663 = vmatprep.subr.mxu0 0.0
  %1664 = vmatpush2.msra.mxu0 0.0
  %1665 = vmatprep.subr.mxu0 0.0
  %1666 = vmatpush2.msra.mxu0 0.0
  %1667 = vmatprep.subr.mxu0 0.0
  %1668 = vmatpush2.msra.mxu0 0.0
  %1669 = vmatprep.subr.mxu0 0.0
  %1670 = vmatpush2.msra.mxu0 0.0
  %1671 = vmatprep.subr.mxu0 0.0
  %1672 = vmatpush2.msra.mxu0 0.0
  %1673 = vmatprep.subr.mxu0 0.0
  %1674 = vmatpush2.msra.mxu0 0.0
  %1675 = vmatprep.mubr.f32.mxu0 0.0
  %v1676 = vand.u32 %v52, 4294901760
  %1677 = vmatmul.mubr.f32.gmra.mxu0 %v1676
  %v1678 = vpop.f32.mrf.mxu0
  %v1679 = vadd.f32 %v1599, %v1678
  %v1680 = vpop.f32.mrf.mxu0
  %v1681 = vadd.f32 %v1601, %v1680
  %1682 = vdwg.mxu0
  %1683 = vmatprep.subr.mxu0 0.0
  %1684 = vmatpush1.msra.mxu0 0.0
  %1685 = vmatprep.subr.mxu0 0.0
  %1686 = vmatpush1.msra.mxu0 0.0
  %1687 = vmatprep.subr.mxu0 0.0
  %1688 = vmatpush1.msra.mxu0 0.0
  %1689 = vmatprep.subr.mxu0 0.0
  %1690 = vmatpush1.msra.mxu0 0.0
  %1691 = vmatprep.subr.mxu0 0.0
  %1692 = vmatpush1.msra.mxu0 0.0
  %1693 = vmatprep.subr.mxu0 0.0
  %1694 = vmatpush1.msra.mxu0 0.0
  %1695 = vmatprep.subr.mxu0 0.0
  %1696 = vmatpush1.msra.mxu0 0.0
  %1697 = vmatprep.subr.mxu0 0.0
  %1698 = vmatpush1.msra.mxu0 0.0
  %1699 = vmatprep.subr.mxu0 0.0
  %1700 = vmatpush1.msra.mxu0 0.0
  %1701 = vmatprep.subr.mxu0 0.0
  %1702 = vmatpush1.msra.mxu0 0.0
  %1703 = vmatprep.subr.mxu0 0.0
  %1704 = vmatpush1.msra.mxu0 0.0
  %1705 = vmatprep.subr.mxu0 0.0
  %1706 = vmatpush1.msra.mxu0 0.0
  %v1707 = vand.u32 %v49, 4294901760
  %1708 = vmatprep.subr.mxu0 %v1707
  %v1709 = vand.u32 %v48, 4294901760
  %1710 = vmatpush1.msra.mxu0 %v1709
  %v1711 = vand.u32 %v41, 4294901760
  %1712 = vmatprep.subr.mxu0 %v1711
  %v1713 = vand.u32 %v40, 4294901760
  %1714 = vmatpush1.msra.mxu0 %v1713
  %v1715 = vand.u32 %v33, 4294901760
  %1716 = vmatprep.subr.mxu0 %v1715
  %v1717 = vand.u32 %v32, 4294901760
  %1718 = vmatpush1.msra.mxu0 %v1717
  %v1719 = vand.u32 %v25, 4294901760
  %1720 = vmatprep.subr.mxu0 %v1719
  %v1721 = vand.u32 %v24, 4294901760
  %1722 = vmatpush1.msra.mxu0 %v1721
  %1723 = vmatprep.subr.mxu0 0.0
  %1724 = vmatpush2.msra.mxu0 0.0
  %1725 = vmatprep.subr.mxu0 0.0
  %1726 = vmatpush2.msra.mxu0 0.0
  %1727 = vmatprep.subr.mxu0 0.0
  %1728 = vmatpush2.msra.mxu0 0.0
  %1729 = vmatprep.subr.mxu0 0.0
  %1730 = vmatpush2.msra.mxu0 0.0
  %1731 = vmatprep.subr.mxu0 0.0
  %1732 = vmatpush2.msra.mxu0 0.0
  %1733 = vmatprep.subr.mxu0 0.0
  %1734 = vmatpush2.msra.mxu0 0.0
  %1735 = vmatprep.subr.mxu0 0.0
  %1736 = vmatpush2.msra.mxu0 0.0
  %1737 = vmatprep.subr.mxu0 0.0
  %1738 = vmatpush2.msra.mxu0 0.0
  %1739 = vmatprep.subr.mxu0 0.0
  %1740 = vmatpush2.msra.mxu0 0.0
  %1741 = vmatprep.subr.mxu0 0.0
  %1742 = vmatpush2.msra.mxu0 0.0
  %1743 = vmatprep.subr.mxu0 0.0
  %1744 = vmatpush2.msra.mxu0 0.0
  %1745 = vmatprep.subr.mxu0 0.0
  %1746 = vmatpush2.msra.mxu0 0.0
  %1747 = vmatprep.subr.mxu0 0.0
  %1748 = vmatpush2.msra.mxu0 0.0
  %1749 = vmatprep.subr.mxu0 0.0
  %1750 = vmatpush2.msra.mxu0 0.0
  %1751 = vmatprep.subr.mxu0 0.0
  %1752 = vmatpush2.msra.mxu0 0.0
  %1753 = vmatprep.subr.mxu0 0.0
  %1754 = vmatpush2.msra.mxu0 0.0
  %1755 = vmatprep.mubr.f32.mxu0 0.0
  %v1756 = vand.u32 %v52, 4294901760
  %v1757 = vsub.f32 %v52, %v1756
  %v1758 = vand.u32 %v1757, 4294901760
  %v1759 = vsub.f32 %v1757, %v1758
  %v1760 = vand.u32 %v1759, 4294901760
  %1761 = vmatmul.mubr.f32.gmra.mxu0 %v1760
  %v1762 = vpop.f32.mrf.mxu0
  %v1763 = vadd.f32 0.0, %v1762
  %v1764 = vpop.f32.mrf.mxu0
  %v1765 = vadd.f32 0.0, %v1764
  %1766 = vdwg.mxu0
  %1767 = vmatprep.subr.mxu0 0.0
  %1768 = vmatpush1.msra.mxu0 0.0
  %1769 = vmatprep.subr.mxu0 0.0
  %1770 = vmatpush1.msra.mxu0 0.0
  %1771 = vmatprep.subr.mxu0 0.0
  %1772 = vmatpush1.msra.mxu0 0.0
  %1773 = vmatprep.subr.mxu0 0.0
  %1774 = vmatpush1.msra.mxu0 0.0
  %1775 = vmatprep.subr.mxu0 0.0
  %1776 = vmatpush1.msra.mxu0 0.0
  %1777 = vmatprep.subr.mxu0 0.0
  %1778 = vmatpush1.msra.mxu0 0.0
  %1779 = vmatprep.subr.mxu0 0.0
  %1780 = vmatpush1.msra.mxu0 0.0
  %1781 = vmatprep.subr.mxu0 0.0
  %1782 = vmatpush1.msra.mxu0 0.0
  %1783 = vmatprep.subr.mxu0 0.0
  %1784 = vmatpush1.msra.mxu0 0.0
  %1785 = vmatprep.subr.mxu0 0.0
  %1786 = vmatpush1.msra.mxu0 0.0
  %1787 = vmatprep.subr.mxu0 0.0
  %1788 = vmatpush1.msra.mxu0 0.0
  %1789 = vmatprep.subr.mxu0 0.0
  %1790 = vmatpush1.msra.mxu0 0.0
  %v1791 = vand.u32 %v49, 4294901760
  %v1792 = vsub.f32 %v49, %v1791
  %v1793 = vand.u32 %v1792, 4294901760
  %v1794 = vsub.f32 %v1792, %v1793
  %v1795 = vand.u32 %v1794, 4294901760
  %1796 = vmatprep.subr.mxu0 %v1795
  %v1797 = vand.u32 %v48, 4294901760
  %v1798 = vsub.f32 %v48, %v1797
  %v1799 = vand.u32 %v1798, 4294901760
  %v1800 = vsub.f32 %v1798, %v1799
  %v1801 = vand.u32 %v1800, 4294901760
  %1802 = vmatpush1.msra.mxu0 %v1801
  %v1803 = vand.u32 %v41, 4294901760
  %v1804 = vsub.f32 %v41, %v1803
  %v1805 = vand.u32 %v1804, 4294901760
  %v1806 = vsub.f32 %v1804, %v1805
  %v1807 = vand.u32 %v1806, 4294901760
  %1808 = vmatprep.subr.mxu0 %v1807
  %v1809 = vand.u32 %v40, 4294901760
  %v1810 = vsub.f32 %v40, %v1809
  %v1811 = vand.u32 %v1810, 4294901760
  %v1812 = vsub.f32 %v1810, %v1811
  %v1813 = vand.u32 %v1812, 4294901760
  %1814 = vmatpush1.msra.mxu0 %v1813
  %v1815 = vand.u32 %v33, 4294901760
  %v1816 = vsub.f32 %v33, %v1815
  %v1817 = vand.u32 %v1816, 4294901760
  %v1818 = vsub.f32 %v1816, %v1817
  %v1819 = vand.u32 %v1818, 4294901760
  %1820 = vmatprep.subr.mxu0 %v1819
  %v1821 = vand.u32 %v32, 4294901760
  %v1822 = vsub.f32 %v32, %v1821
  %v1823 = vand.u32 %v1822, 4294901760
  %v1824 = vsub.f32 %v1822, %v1823
  %v1825 = vand.u32 %v1824, 4294901760
  %1826 = vmatpush1.msra.mxu0 %v1825
  %v1827 = vand.u32 %v25, 4294901760
  %v1828 = vsub.f32 %v25, %v1827
  %v1829 = vand.u32 %v1828, 4294901760
  %v1830 = vsub.f32 %v1828, %v1829
  %v1831 = vand.u32 %v1830, 4294901760
  %1832 = vmatprep.subr.mxu0 %v1831
  %v1833 = vand.u32 %v24, 4294901760
  %v1834 = vsub.f32 %v24, %v1833
  %v1835 = vand.u32 %v1834, 4294901760
  %v1836 = vsub.f32 %v1834, %v1835
  %v1837 = vand.u32 %v1836, 4294901760
  %1838 = vmatpush1.msra.mxu0 %v1837
  %1839 = vmatprep.subr.mxu0 0.0
  %1840 = vmatpush2.msra.mxu0 0.0
  %1841 = vmatprep.subr.mxu0 0.0
  %1842 = vmatpush2.msra.mxu0 0.0
  %1843 = vmatprep.subr.mxu0 0.0
  %1844 = vmatpush2.msra.mxu0 0.0
  %1845 = vmatprep.subr.mxu0 0.0
  %1846 = vmatpush2.msra.mxu0 0.0
  %1847 = vmatprep.subr.mxu0 0.0
  %1848 = vmatpush2.msra.mxu0 0.0
  %1849 = vmatprep.subr.mxu0 0.0
  %1850 = vmatpush2.msra.mxu0 0.0
  %1851 = vmatprep.subr.mxu0 0.0
  %1852 = vmatpush2.msra.mxu0 0.0
  %1853 = vmatprep.subr.mxu0 0.0
  %1854 = vmatpush2.msra.mxu0 0.0
  %1855 = vmatprep.subr.mxu0 0.0
  %1856 = vmatpush2.msra.mxu0 0.0
  %1857 = vmatprep.subr.mxu0 0.0
  %1858 = vmatpush2.msra.mxu0 0.0
  %1859 = vmatprep.subr.mxu0 0.0
  %1860 = vmatpush2.msra.mxu0 0.0
  %1861 = vmatprep.subr.mxu0 0.0
  %1862 = vmatpush2.msra.mxu0 0.0
  %1863 = vmatprep.subr.mxu0 0.0
  %1864 = vmatpush2.msra.mxu0 0.0
  %1865 = vmatprep.subr.mxu0 0.0
  %1866 = vmatpush2.msra.mxu0 0.0
  %1867 = vmatprep.subr.mxu0 0.0
  %1868 = vmatpush2.msra.mxu0 0.0
  %1869 = vmatprep.subr.mxu0 0.0
  %1870 = vmatpush2.msra.mxu0 0.0
  %1871 = vmatprep.mubr.f32.mxu0 0.0
  %v1872 = vand.u32 %v52, 4294901760
  %1873 = vmatmul.mubr.f32.gmra.mxu0 %v1872
  %v1874 = vpop.f32.mrf.mxu0
  %v1875 = vadd.f32 %v1763, %v1874
  %v1876 = vpop.f32.mrf.mxu0
  %v1877 = vadd.f32 %v1765, %v1876
  %1878 = vdwg.mxu0
  %1879 = vmatprep.subr.mxu0 0.0
  %1880 = vmatpush1.msra.mxu0 0.0
  %1881 = vmatprep.subr.mxu0 0.0
  %1882 = vmatpush1.msra.mxu0 0.0
  %1883 = vmatprep.subr.mxu0 0.0
  %1884 = vmatpush1.msra.mxu0 0.0
  %1885 = vmatprep.subr.mxu0 0.0
  %1886 = vmatpush1.msra.mxu0 0.0
  %1887 = vmatprep.subr.mxu0 0.0
  %1888 = vmatpush1.msra.mxu0 0.0
  %1889 = vmatprep.subr.mxu0 0.0
  %1890 = vmatpush1.msra.mxu0 0.0
  %1891 = vmatprep.subr.mxu0 0.0
  %1892 = vmatpush1.msra.mxu0 0.0
  %1893 = vmatprep.subr.mxu0 0.0
  %1894 = vmatpush1.msra.mxu0 0.0
  %1895 = vmatprep.subr.mxu0 0.0
  %1896 = vmatpush1.msra.mxu0 0.0
  %1897 = vmatprep.subr.mxu0 0.0
  %1898 = vmatpush1.msra.mxu0 0.0
  %1899 = vmatprep.subr.mxu0 0.0
  %1900 = vmatpush1.msra.mxu0 0.0
  %1901 = vmatprep.subr.mxu0 0.0
  %1902 = vmatpush1.msra.mxu0 0.0
  %v1903 = vand.u32 %v49, 4294901760
  %v1904 = vsub.f32 %v49, %v1903
  %1905 = vmatprep.subr.mxu0 %v1904
  %v1906 = vand.u32 %v48, 4294901760
  %v1907 = vsub.f32 %v48, %v1906
  %1908 = vmatpush1.msra.mxu0 %v1907
  %v1909 = vand.u32 %v41, 4294901760
  %v1910 = vsub.f32 %v41, %v1909
  %1911 = vmatprep.subr.mxu0 %v1910
  %v1912 = vand.u32 %v40, 4294901760
  %v1913 = vsub.f32 %v40, %v1912
  %1914 = vmatpush1.msra.mxu0 %v1913
  %v1915 = vand.u32 %v33, 4294901760
  %v1916 = vsub.f32 %v33, %v1915
  %1917 = vmatprep.subr.mxu0 %v1916
  %v1918 = vand.u32 %v32, 4294901760
  %v1919 = vsub.f32 %v32, %v1918
  %1920 = vmatpush1.msra.mxu0 %v1919
  %v1921 = vand.u32 %v25, 4294901760
  %v1922 = vsub.f32 %v25, %v1921
  %1923 = vmatprep.subr.mxu0 %v1922
  %v1924 = vand.u32 %v24, 4294901760
  %v1925 = vsub.f32 %v24, %v1924
  %1926 = vmatpush1.msra.mxu0 %v1925
  %1927 = vmatprep.subr.mxu0 0.0
  %1928 = vmatpush2.msra.mxu0 0.0
  %1929 = vmatprep.subr.mxu0 0.0
  %1930 = vmatpush2.msra.mxu0 0.0
  %1931 = vmatprep.subr.mxu0 0.0
  %1932 = vmatpush2.msra.mxu0 0.0
  %1933 = vmatprep.subr.mxu0 0.0
  %1934 = vmatpush2.msra.mxu0 0.0
  %1935 = vmatprep.subr.mxu0 0.0
  %1936 = vmatpush2.msra.mxu0 0.0
  %1937 = vmatprep.subr.mxu0 0.0
  %1938 = vmatpush2.msra.mxu0 0.0
  %1939 = vmatprep.subr.mxu0 0.0
  %1940 = vmatpush2.msra.mxu0 0.0
  %1941 = vmatprep.subr.mxu0 0.0
  %1942 = vmatpush2.msra.mxu0 0.0
  %1943 = vmatprep.subr.mxu0 0.0
  %1944 = vmatpush2.msra.mxu0 0.0
  %1945 = vmatprep.subr.mxu0 0.0
  %1946 = vmatpush2.msra.mxu0 0.0
  %1947 = vmatprep.subr.mxu0 0.0
  %1948 = vmatpush2.msra.mxu0 0.0
  %1949 = vmatprep.subr.mxu0 0.0
  %1950 = vmatpush2.msra.mxu0 0.0
  %1951 = vmatprep.subr.mxu0 0.0
  %1952 = vmatpush2.msra.mxu0 0.0
  %1953 = vmatprep.subr.mxu0 0.0
  %1954 = vmatpush2.msra.mxu0 0.0
  %1955 = vmatprep.subr.mxu0 0.0
  %1956 = vmatpush2.msra.mxu0 0.0
  %1957 = vmatprep.subr.mxu0 0.0
  %1958 = vmatpush2.msra.mxu0 0.0
  %1959 = vmatprep.mubr.f32.mxu0 0.0
  %v1960 = vand.u32 %v52, 4294901760
  %v1961 = vsub.f32 %v52, %v1960
  %1962 = vmatmul.mubr.f32.gmra.mxu0 %v1961
  %v1963 = vpop.f32.mrf.mxu0
  %v1964 = vadd.f32 %v1875, %v1963
  %v1965 = vpop.f32.mrf.mxu0
  %v1966 = vadd.f32 %v1877, %v1965
  %1967 = vdwg.mxu0
  %1968 = vmatprep.subr.mxu0 0.0
  %1969 = vmatpush1.msra.mxu0 0.0
  %1970 = vmatprep.subr.mxu0 0.0
  %1971 = vmatpush1.msra.mxu0 0.0
  %1972 = vmatprep.subr.mxu0 0.0
  %1973 = vmatpush1.msra.mxu0 0.0
  %1974 = vmatprep.subr.mxu0 0.0
  %1975 = vmatpush1.msra.mxu0 0.0
  %1976 = vmatprep.subr.mxu0 0.0
  %1977 = vmatpush1.msra.mxu0 0.0
  %1978 = vmatprep.subr.mxu0 0.0
  %1979 = vmatpush1.msra.mxu0 0.0
  %1980 = vmatprep.subr.mxu0 0.0
  %1981 = vmatpush1.msra.mxu0 0.0
  %1982 = vmatprep.subr.mxu0 0.0
  %1983 = vmatpush1.msra.mxu0 0.0
  %1984 = vmatprep.subr.mxu0 0.0
  %1985 = vmatpush1.msra.mxu0 0.0
  %1986 = vmatprep.subr.mxu0 0.0
  %1987 = vmatpush1.msra.mxu0 0.0
  %1988 = vmatprep.subr.mxu0 0.0
  %1989 = vmatpush1.msra.mxu0 0.0
  %1990 = vmatprep.subr.mxu0 0.0
  %1991 = vmatpush1.msra.mxu0 0.0
  %v1992 = vand.u32 %v49, 4294901760
  %1993 = vmatprep.subr.mxu0 %v1992
  %v1994 = vand.u32 %v48, 4294901760
  %1995 = vmatpush1.msra.mxu0 %v1994
  %v1996 = vand.u32 %v41, 4294901760
  %1997 = vmatprep.subr.mxu0 %v1996
  %v1998 = vand.u32 %v40, 4294901760
  %1999 = vmatpush1.msra.mxu0 %v1998
  %v2000 = vand.u32 %v33, 4294901760
  %2001 = vmatprep.subr.mxu0 %v2000
  %v2002 = vand.u32 %v32, 4294901760
  %2003 = vmatpush1.msra.mxu0 %v2002
  %v2004 = vand.u32 %v25, 4294901760
  %2005 = vmatprep.subr.mxu0 %v2004
  %v2006 = vand.u32 %v24, 4294901760
  %2007 = vmatpush1.msra.mxu0 %v2006
  %2008 = vmatprep.subr.mxu0 0.0
  %2009 = vmatpush2.msra.mxu0 0.0
  %2010 = vmatprep.subr.mxu0 0.0
  %2011 = vmatpush2.msra.mxu0 0.0
  %2012 = vmatprep.subr.mxu0 0.0
  %2013 = vmatpush2.msra.mxu0 0.0
  %2014 = vmatprep.subr.mxu0 0.0
  %2015 = vmatpush2.msra.mxu0 0.0
  %2016 = vmatprep.subr.mxu0 0.0
  %2017 = vmatpush2.msra.mxu0 0.0
  %2018 = vmatprep.subr.mxu0 0.0
  %2019 = vmatpush2.msra.mxu0 0.0
  %2020 = vmatprep.subr.mxu0 0.0
  %2021 = vmatpush2.msra.mxu0 0.0
  %2022 = vmatprep.subr.mxu0 0.0
  %2023 = vmatpush2.msra.mxu0 0.0
  %2024 = vmatprep.subr.mxu0 0.0
  %2025 = vmatpush2.msra.mxu0 0.0
  %2026 = vmatprep.subr.mxu0 0.0
  %2027 = vmatpush2.msra.mxu0 0.0
  %2028 = vmatprep.subr.mxu0 0.0
  %2029 = vmatpush2.msra.mxu0 0.0
  %2030 = vmatprep.subr.mxu0 0.0
  %2031 = vmatpush2.msra.mxu0 0.0
  %2032 = vmatprep.subr.mxu0 0.0
  %2033 = vmatpush2.msra.mxu0 0.0
  %2034 = vmatprep.subr.mxu0 0.0
  %2035 = vmatpush2.msra.mxu0 0.0
  %2036 = vmatprep.subr.mxu0 0.0
  %2037 = vmatpush2.msra.mxu0 0.0
  %2038 = vmatprep.subr.mxu0 0.0
  %2039 = vmatpush2.msra.mxu0 0.0
  %2040 = vmatprep.mubr.f32.mxu0 0.0
  %v2041 = vand.u32 %v52, 4294901760
  %v2042 = vsub.f32 %v52, %v2041
  %v2043 = vand.u32 %v2042, 4294901760
  %2044 = vmatmul.mubr.f32.gmra.mxu0 %v2043
  %v2045 = vpop.f32.mrf.mxu0
  %v2046 = vadd.f32 %v1964, %v2045
  %v2047 = vpop.f32.mrf.mxu0
  %v2048 = vadd.f32 %v1966, %v2047
  %2049 = vdwg.mxu0
  %2050 = vmatprep.subr.mxu0 0.0
  %2051 = vmatpush1.msra.mxu0 0.0
  %2052 = vmatprep.subr.mxu0 0.0
  %2053 = vmatpush1.msra.mxu0 0.0
  %2054 = vmatprep.subr.mxu0 0.0
  %2055 = vmatpush1.msra.mxu0 0.0
  %2056 = vmatprep.subr.mxu0 0.0
  %2057 = vmatpush1.msra.mxu0 0.0
  %2058 = vmatprep.subr.mxu0 0.0
  %2059 = vmatpush1.msra.mxu0 0.0
  %2060 = vmatprep.subr.mxu0 0.0
  %2061 = vmatpush1.msra.mxu0 0.0
  %2062 = vmatprep.subr.mxu0 0.0
  %2063 = vmatpush1.msra.mxu0 0.0
  %2064 = vmatprep.subr.mxu0 0.0
  %2065 = vmatpush1.msra.mxu0 0.0
  %2066 = vmatprep.subr.mxu0 0.0
  %2067 = vmatpush1.msra.mxu0 0.0
  %2068 = vmatprep.subr.mxu0 0.0
  %2069 = vmatpush1.msra.mxu0 0.0
  %2070 = vmatprep.subr.mxu0 0.0
  %2071 = vmatpush1.msra.mxu0 0.0
  %2072 = vmatprep.subr.mxu0 0.0
  %2073 = vmatpush1.msra.mxu0 0.0
  %v2074 = vand.u32 %v49, 4294901760
  %v2075 = vsub.f32 %v49, %v2074
  %v2076 = vand.u32 %v2075, 4294901760
  %2077 = vmatprep.subr.mxu0 %v2076
  %v2078 = vand.u32 %v48, 4294901760
  %v2079 = vsub.f32 %v48, %v2078
  %v2080 = vand.u32 %v2079, 4294901760
  %2081 = vmatpush1.msra.mxu0 %v2080
  %v2082 = vand.u32 %v41, 4294901760
  %v2083 = vsub.f32 %v41, %v2082
  %v2084 = vand.u32 %v2083, 4294901760
  %2085 = vmatprep.subr.mxu0 %v2084
  %v2086 = vand.u32 %v40, 4294901760
  %v2087 = vsub.f32 %v40, %v2086
  %v2088 = vand.u32 %v2087, 4294901760
  %2089 = vmatpush1.msra.mxu0 %v2088
  %v2090 = vand.u32 %v33, 4294901760
  %v2091 = vsub.f32 %v33, %v2090
  %v2092 = vand.u32 %v2091, 4294901760
  %2093 = vmatprep.subr.mxu0 %v2092
  %v2094 = vand.u32 %v32, 4294901760
  %v2095 = vsub.f32 %v32, %v2094
  %v2096 = vand.u32 %v2095, 4294901760
  %2097 = vmatpush1.msra.mxu0 %v2096
  %v2098 = vand.u32 %v25, 4294901760
  %v2099 = vsub.f32 %v25, %v2098
  %v2100 = vand.u32 %v2099, 4294901760
  %2101 = vmatprep.subr.mxu0 %v2100
  %v2102 = vand.u32 %v24, 4294901760
  %v2103 = vsub.f32 %v24, %v2102
  %v2104 = vand.u32 %v2103, 4294901760
  %2105 = vmatpush1.msra.mxu0 %v2104
  %2106 = vmatprep.subr.mxu0 0.0
  %2107 = vmatpush2.msra.mxu0 0.0
  %2108 = vmatprep.subr.mxu0 0.0
  %2109 = vmatpush2.msra.mxu0 0.0
  %2110 = vmatprep.subr.mxu0 0.0
  %2111 = vmatpush2.msra.mxu0 0.0
  %2112 = vmatprep.subr.mxu0 0.0
  %2113 = vmatpush2.msra.mxu0 0.0
  %2114 = vmatprep.subr.mxu0 0.0
  %2115 = vmatpush2.msra.mxu0 0.0
  %2116 = vmatprep.subr.mxu0 0.0
  %2117 = vmatpush2.msra.mxu0 0.0
  %2118 = vmatprep.subr.mxu0 0.0
  %2119 = vmatpush2.msra.mxu0 0.0
  %2120 = vmatprep.subr.mxu0 0.0
  %2121 = vmatpush2.msra.mxu0 0.0
  %2122 = vmatprep.subr.mxu0 0.0
  %2123 = vmatpush2.msra.mxu0 0.0
  %2124 = vmatprep.subr.mxu0 0.0
  %2125 = vmatpush2.msra.mxu0 0.0
  %2126 = vmatprep.subr.mxu0 0.0
  %2127 = vmatpush2.msra.mxu0 0.0
  %2128 = vmatprep.subr.mxu0 0.0
  %2129 = vmatpush2.msra.mxu0 0.0
  %2130 = vmatprep.subr.mxu0 0.0
  %2131 = vmatpush2.msra.mxu0 0.0
  %2132 = vmatprep.subr.mxu0 0.0
  %2133 = vmatpush2.msra.mxu0 0.0
  %2134 = vmatprep.subr.mxu0 0.0
  %2135 = vmatpush2.msra.mxu0 0.0
  %2136 = vmatprep.subr.mxu0 0.0
  %2137 = vmatpush2.msra.mxu0 0.0
  %2138 = vmatprep.mubr.f32.mxu0 0.0
  %v2139 = vand.u32 %v52, 4294901760
  %2140 = vmatmul.mubr.f32.gmra.mxu0 %v2139
  %v2141 = vpop.f32.mrf.mxu0
  %v2142 = vadd.f32 %v2046, %v2141
  %v2143 = vpop.f32.mrf.mxu0
  %v2144 = vadd.f32 %v2048, %v2143
  %2145 = vdwg.mxu0
  %2146 = vmatprep.subr.mxu0 0.0
  %2147 = vmatpush1.msra.mxu0 0.0
  %2148 = vmatprep.subr.mxu0 0.0
  %2149 = vmatpush1.msra.mxu0 0.0
  %2150 = vmatprep.subr.mxu0 0.0
  %2151 = vmatpush1.msra.mxu0 0.0
  %2152 = vmatprep.subr.mxu0 0.0
  %2153 = vmatpush1.msra.mxu0 0.0
  %2154 = vmatprep.subr.mxu0 0.0
  %2155 = vmatpush1.msra.mxu0 0.0
  %2156 = vmatprep.subr.mxu0 0.0
  %2157 = vmatpush1.msra.mxu0 0.0
  %2158 = vmatprep.subr.mxu0 0.0
  %2159 = vmatpush1.msra.mxu0 0.0
  %2160 = vmatprep.subr.mxu0 0.0
  %2161 = vmatpush1.msra.mxu0 0.0
  %2162 = vmatprep.subr.mxu0 0.0
  %2163 = vmatpush1.msra.mxu0 0.0
  %2164 = vmatprep.subr.mxu0 0.0
  %2165 = vmatpush1.msra.mxu0 0.0
  %2166 = vmatprep.subr.mxu0 0.0
  %2167 = vmatpush1.msra.mxu0 0.0
  %2168 = vmatprep.subr.mxu0 0.0
  %2169 = vmatpush1.msra.mxu0 0.0
  %v2170 = vand.u32 %v49, 4294901760
  %2171 = vmatprep.subr.mxu0 %v2170
  %v2172 = vand.u32 %v48, 4294901760
  %2173 = vmatpush1.msra.mxu0 %v2172
  %v2174 = vand.u32 %v41, 4294901760
  %2175 = vmatprep.subr.mxu0 %v2174
  %v2176 = vand.u32 %v40, 4294901760
  %2177 = vmatpush1.msra.mxu0 %v2176
  %v2178 = vand.u32 %v33, 4294901760
  %2179 = vmatprep.subr.mxu0 %v2178
  %v2180 = vand.u32 %v32, 4294901760
  %2181 = vmatpush1.msra.mxu0 %v2180
  %v2182 = vand.u32 %v25, 4294901760
  %2183 = vmatprep.subr.mxu0 %v2182
  %v2184 = vand.u32 %v24, 4294901760
  %2185 = vmatpush1.msra.mxu0 %v2184
  %2186 = vmatprep.subr.mxu0 0.0
  %2187 = vmatpush2.msra.mxu0 0.0
  %2188 = vmatprep.subr.mxu0 0.0
  %2189 = vmatpush2.msra.mxu0 0.0
  %2190 = vmatprep.subr.mxu0 0.0
  %2191 = vmatpush2.msra.mxu0 0.0
  %2192 = vmatprep.subr.mxu0 0.0
  %2193 = vmatpush2.msra.mxu0 0.0
  %2194 = vmatprep.subr.mxu0 0.0
  %2195 = vmatpush2.msra.mxu0 0.0
  %2196 = vmatprep.subr.mxu0 0.0
  %2197 = vmatpush2.msra.mxu0 0.0
  %2198 = vmatprep.subr.mxu0 0.0
  %2199 = vmatpush2.msra.mxu0 0.0
  %2200 = vmatprep.subr.mxu0 0.0
  %2201 = vmatpush2.msra.mxu0 0.0
  %2202 = vmatprep.subr.mxu0 0.0
  %2203 = vmatpush2.msra.mxu0 0.0
  %2204 = vmatprep.subr.mxu0 0.0
  %2205 = vmatpush2.msra.mxu0 0.0
  %2206 = vmatprep.subr.mxu0 0.0
  %2207 = vmatpush2.msra.mxu0 0.0
  %2208 = vmatprep.subr.mxu0 0.0
  %2209 = vmatpush2.msra.mxu0 0.0
  %2210 = vmatprep.subr.mxu0 0.0
  %2211 = vmatpush2.msra.mxu0 0.0
  %2212 = vmatprep.subr.mxu0 0.0
  %2213 = vmatpush2.msra.mxu0 0.0
  %2214 = vmatprep.subr.mxu0 0.0
  %2215 = vmatpush2.msra.mxu0 0.0
  %2216 = vmatprep.subr.mxu0 0.0
  %2217 = vmatpush2.msra.mxu0 0.0
  %2218 = vmatprep.mubr.f32.mxu0 0.0
  %v2219 = vand.u32 %v52, 4294901760
  %2220 = vmatmul.mubr.f32.gmra.mxu0 %v2219
  %v2221 = vpop.f32.mrf.mxu0
  %v2222 = vadd.f32 %v2142, %v2221
  %v2223 = vpop.f32.mrf.mxu0
  %v2224 = vadd.f32 %v2144, %v2223
  %2225 = vdwg.mxu0
  %v2226 = vld [vmem:[%s2] sm:$0xff]
  %v2228 = vlaneseq
  %v2229 = vshrl.u32 %v2228, 7
  %v2230 = vsub.s32 0, %v2229
  %v2231 = vrot.slane %v2226, %v2230
  %v2232 = vlaneseq
  %v2233 = vshrl.u32 %v2232, 7
  %v2234 = vsub.s32 1, %v2233
  %v2235 = vrot.slane %v2226, %v2234
  %v2236 = vlaneseq
  %v2237 = vshrl.u32 %v2236, 7
  %v2238 = vsub.s32 2, %v2237
  %v2239 = vrot.slane %v2226, %v2238
  %v2240 = vlaneseq
  %v2241 = vshrl.u32 %v2240, 7
  %v2242 = vsub.s32 3, %v2241
  %v2243 = vrot.slane %v2226, %v2242
  %v2244 = vlaneseq
  %v2245 = vshrl.u32 %v2244, 7
  %v2246 = vsub.s32 4, %v2245
  %v2247 = vrot.slane %v2226, %v2246
  %v2248 = vlaneseq
  %v2249 = vshrl.u32 %v2248, 7
  %v2250 = vsub.s32 5, %v2249
  %v2251 = vrot.slane %v2226, %v2250
  %v2252 = vlaneseq
  %v2253 = vshrl.u32 %v2252, 7
  %v2254 = vsub.s32 6, %v2253
  %v2255 = vrot.slane %v2226, %v2254
  %v2256 = vlaneseq
  %v2257 = vshrl.u32 %v2256, 7
  %v2258 = vsub.s32 7, %v2257
  %v2259 = vrot.slane %v2226, %v2258
  %v2268 = vmul.f32 %v593, %v2231
  %v2269 = vmul.f32 %v595, %v2235
  %v2270 = vmul.f32 %v1136, %v2239
  %v2271 = vmul.f32 %v1138, %v2243
  %v2272 = vmul.f32 %v1679, %v2247
  %v2273 = vmul.f32 %v1681, %v2251
  %v2274 = vmul.f32 %v2222, %v2255
  %v2275 = vmul.f32 %v2224, %v2259
  %v2276 = vld [vmem:[%s3] sm:$0xff]
  %v2278 = vlaneseq
  %v2279 = vshrl.u32 %v2278, 7
  %v2280 = vsub.s32 0, %v2279
  %v2281 = vrot.slane %v2276, %v2280
  %v2282 = vlaneseq
  %v2283 = vshrl.u32 %v2282, 7
  %v2284 = vsub.s32 1, %v2283
  %v2285 = vrot.slane %v2276, %v2284
  %v2286 = vlaneseq
  %v2287 = vshrl.u32 %v2286, 7
  %v2288 = vsub.s32 2, %v2287
  %v2289 = vrot.slane %v2276, %v2288
  %v2290 = vlaneseq
  %v2291 = vshrl.u32 %v2290, 7
  %v2292 = vsub.s32 3, %v2291
  %v2293 = vrot.slane %v2276, %v2292
  %v2294 = vlaneseq
  %v2295 = vshrl.u32 %v2294, 7
  %v2296 = vsub.s32 4, %v2295
  %v2297 = vrot.slane %v2276, %v2296
  %v2298 = vlaneseq
  %v2299 = vshrl.u32 %v2298, 7
  %v2300 = vsub.s32 5, %v2299
  %v2301 = vrot.slane %v2276, %v2300
  %v2302 = vlaneseq
  %v2303 = vshrl.u32 %v2302, 7
  %v2304 = vsub.s32 6, %v2303
  %v2305 = vrot.slane %v2276, %v2304
  %v2306 = vlaneseq
  %v2307 = vshrl.u32 %v2306, 7
  %v2308 = vsub.s32 7, %v2307
  %v2309 = vrot.slane %v2276, %v2308
  %v2318 = vadd.f32 %v2268, %v2281
  %v2319 = vadd.f32 %v2269, %v2285
  %v2320 = vadd.f32 %v2270, %v2289
  %v2321 = vadd.f32 %v2271, %v2293
  %v2322 = vadd.f32 %v2272, %v2297
  %v2323 = vadd.f32 %v2273, %v2301
  %v2324 = vadd.f32 %v2274, %v2305
  %v2325 = vadd.f32 %v2275, %v2309
  %v2326 = vand.u32 2147483647, %v2318
  %vm2327 = vcmp.le.f32.partialorder %v2326, 0.7853982
  %vm2328 = vcmp.lt.s32.totalorder %v2318, 0
  %v2329 = vand.u32 %v2318, 2139095040
  %v2330 = vshrl.u32 %v2329, 23
  %v2331 = vsub.s32 %v2330, 127
  %v2332 = vand.u32 2147483647, %v2318
  %v2333 = vand.u32 %v2332, 8388607
  %v2334 = vor.u32 %v2333, 8388608
  %v2335 = vsub.s32 0, %v2334
  %v2336 = vadd.s32 %v2331, 1
  %vm2337 = vcmp.gt.s32.totalorder %v2336, 0
  %v2338 = vsel %vm2337, %v2336, 0
  %v2339 = vshrl.u32 %v2338, 5
  %v2340 = vand.u32 %v2338, 31
  %v2341 = vsub.s32 32, %v2340
  %v2342 = vshrl.u32 683565275, %v2341
  %v2343 = vshll.u32 683565275, %v2340
  %v2344 = vshrl.u32 2475754826, %v2341
  %v2345 = vor.u32 %v2343, %v2344
  %v2346 = vshll.u32 2475754826, %v2340
  %v2347 = vshrl.u32 2131351028, %v2341
  %v2348 = vor.u32 %v2346, %v2347
  %v2349 = vshll.u32 2131351028, %v2340
  %v2350 = vshrl.u32 2102212464, %v2341
  %v2351 = vor.u32 %v2349, %v2350
  %v2352 = vshll.u32 2102212464, %v2340
  %v2353 = vshrl.u32 920167782, %v2341
  %v2354 = vor.u32 %v2352, %v2353
  %v2355 = vshll.u32 920167782, %v2340
  %v2356 = vshrl.u32 1326507024, %v2341
  %v2357 = vor.u32 %v2355, %v2356
  %vm2358 = vcmp.lt.s32.totalorder %v2339, 1
  %vm2359 = vcmp.lt.s32.totalorder %v2339, 2
  %vm2360 = vcmp.lt.s32.totalorder %v2339, 3
  %vm2361 = vcmp.lt.s32.totalorder %v2339, 4
  %v2362 = vsel %vm2358, %v2342, %v2345
  %v2363 = vsel %vm2361, %v2351, 2102212464
  %v2364 = vsel %vm2360, %v2348, %v2363
  %v2365 = vsel %vm2359, %v2362, %v2364
  %v2366 = vsel %vm2358, %v2345, %v2348
  %v2367 = vsel %vm2361, %v2354, 920167782
  %v2368 = vsel %vm2360, %v2351, %v2367
  %v2369 = vsel %vm2359, %v2366, %v2368
  %v2370 = vsel %vm2358, %v2348, %v2351
  %v2371 = vsel %vm2361, %v2357, 1326507024
  %v2372 = vsel %vm2360, %v2354, %v2371
  %v2373 = vsel %vm2359, %v2370, %v2372
  %v2374 = vshll.u32 %v2334, 8
  %v2375 = vmul.u32.u64.compose %v2374, %v2373
  %v2376 = vextract.low.u32 %v2375
  %v2377 = vextract.high.u32 %v2375
  %v2378 = vmul.u32.u64.compose %v2374, %v2369
  %v2379 = vextract.low.u32 %v2378
  %v2380 = vextract.high.u32 %v2378
  %v2381 = vmul.u32 %v2374, %v2365
  %v2382 = vadd.s32 %v2377, %v2379
  %vm2383 = vc.u32 %v2377, %v2379
  %v2384 = vadd.s32 %v2380, 1
  %v2385 = vsel %vm2383, %v2384, %v2380
  %v2386 = vadd.s32 %v2381, %v2385
  %v2387 = vadd.s32 %v2386, 536870912
  %v2388 = vshrl.u32 %v2387, 30
  %v2389 = vshll.u32 %v2388, 30
  %v2390 = vsub.s32 %v2386, %v2389
  %vm2391 = vcmp.lt.s32.totalorder %v2390, 0
  %v2392 = vsub.s32 0, %v2390
  %v2393 = vsel %vm2391, %v2392, %v2390
  %v2394 = vclz %v2393
  %v2395 = vsub.s32 %v2394, 2
  %vm2396 = vcmp.gt.s32.totalorder 0, %v2395
  %v2397 = vsel %vm2396, 0, %v2395
  %v2398 = vsub.s32 32, %v2397
  %v2399 = vshll.u32 %v2390, %v2397
  %v2400 = vshrl.u32 %v2382, %v2398
  %v2401 = vor.u32 %v2399, %v2400
  %v2402 = vsub.s32 4294967266, %v2397
  %v2403 = vadd.s32 %v2402, 127
  %v2404 = vshll.u32 %v2403, 23
  %v2405 = vor.u32 4788187, %v2404
  %v2406 = vand.u32 2147483647, %v2405
  %v2408 = vcvt.s32.f32 %v2401
  %v2409 = vmul.f32 %v2408, %v2406
  %v2410 = vxor.u32 %v2409, 2147483648
  %v2411 = vsel %vm2328, %v2410, %v2409
  %v2412 = vsub.s32 4, %v2388
  %v2413 = vsel %vm2328, %v2412, %v2388
  %v2414 = vsel %vm2327, %v2318, %v2411
  %v2415 = vsel %vm2327, 0, %v2413
  %v2416 = vcosq.f32.pop %v2414
  %v2417 = vsinq.f32.pop %v2414
  %vm2418 = vweird.f32 %v2318
  %v2419 = vand.u32 %v2415, 3
  %vm2420 = vcmp.lt.s32.totalorder %v2419, 2
  %vm2421 = vcmp.eq.s32.totalorder %v2419, 0
  %v2422 = vxor.u32 %v2417, 2147483648
  %v2423 = vsel %vm2421, %v2416, %v2422
  %vm2424 = vcmp.eq.s32.totalorder %v2419, 2
  %v2425 = vxor.u32 %v2416, 2147483648
  %v2426 = vsel %vm2424, %v2425, %v2417
  %v2427 = vsel %vm2420, %v2423, %v2426
  %v2428 = vsel %vm2418, nan, %v2427
  %v2429 = vand.u32 2147483647, %v2319
  %vm2430 = vcmp.le.f32.partialorder %v2429, 0.7853982
  %vm2431 = vcmp.lt.s32.totalorder %v2319, 0
  %v2432 = vand.u32 %v2319, 2139095040
  %v2433 = vshrl.u32 %v2432, 23
  %v2434 = vsub.s32 %v2433, 127
  %v2435 = vand.u32 2147483647, %v2319
  %v2436 = vand.u32 %v2435, 8388607
  %v2437 = vor.u32 %v2436, 8388608
  %v2438 = vsub.s32 0, %v2437
  %v2439 = vadd.s32 %v2434, 1
  %vm2440 = vcmp.gt.s32.totalorder %v2439, 0
  %v2441 = vsel %vm2440, %v2439, 0
  %v2442 = vshrl.u32 %v2441, 5
  %v2443 = vand.u32 %v2441, 31
  %v2444 = vsub.s32 32, %v2443
  %v2445 = vshrl.u32 683565275, %v2444
  %v2446 = vshll.u32 683565275, %v2443
  %v2447 = vshrl.u32 2475754826, %v2444
  %v2448 = vor.u32 %v2446, %v2447
  %v2449 = vshll.u32 2475754826, %v2443
  %v2450 = vshrl.u32 2131351028, %v2444
  %v2451 = vor.u32 %v2449, %v2450
  %v2452 = vshll.u32 2131351028, %v2443
  %v2453 = vshrl.u32 2102212464, %v2444
  %v2454 = vor.u32 %v2452, %v2453
  %v2455 = vshll.u32 2102212464, %v2443
  %v2456 = vshrl.u32 920167782, %v2444
  %v2457 = vor.u32 %v2455, %v2456
  %v2458 = vshll.u32 920167782, %v2443
  %v2459 = vshrl.u32 1326507024, %v2444
  %v2460 = vor.u32 %v2458, %v2459
  %vm2461 = vcmp.lt.s32.totalorder %v2442, 1
  %vm2462 = vcmp.lt.s32.totalorder %v2442, 2
  %vm2463 = vcmp.lt.s32.totalorder %v2442, 3
  %vm2464 = vcmp.lt.s32.totalorder %v2442, 4
  %v2465 = vsel %vm2461, %v2445, %v2448
  %v2466 = vsel %vm2464, %v2454, 2102212464
  %v2467 = vsel %vm2463, %v2451, %v2466
  %v2468 = vsel %vm2462, %v2465, %v2467
  %v2469 = vsel %vm2461, %v2448, %v2451
  %v2470 = vsel %vm2464, %v2457, 920167782
  %v2471 = vsel %vm2463, %v2454, %v2470
  %v2472 = vsel %vm2462, %v2469, %v2471
  %v2473 = vsel %vm2461, %v2451, %v2454
  %v2474 = vsel %vm2464, %v2460, 1326507024
  %v2475 = vsel %vm2463, %v2457, %v2474
  %v2476 = vsel %vm2462, %v2473, %v2475
  %v2477 = vshll.u32 %v2437, 8
  %v2478 = vmul.u32.u64.compose %v2477, %v2476
  %v2479 = vextract.low.u32 %v2478
  %v2480 = vextract.high.u32 %v2478
  %v2481 = vmul.u32.u64.compose %v2477, %v2472
  %v2482 = vextract.low.u32 %v2481
  %v2483 = vextract.high.u32 %v2481
  %v2484 = vmul.u32 %v2477, %v2468
  %v2485 = vadd.s32 %v2480, %v2482
  %vm2486 = vc.u32 %v2480, %v2482
  %v2487 = vadd.s32 %v2483, 1
  %v2488 = vsel %vm2486, %v2487, %v2483
  %v2489 = vadd.s32 %v2484, %v2488
  %v2490 = vadd.s32 %v2489, 536870912
  %v2491 = vshrl.u32 %v2490, 30
  %v2492 = vshll.u32 %v2491, 30
  %v2493 = vsub.s32 %v2489, %v2492
  %vm2494 = vcmp.lt.s32.totalorder %v2493, 0
  %v2495 = vsub.s32 0, %v2493
  %v2496 = vsel %vm2494, %v2495, %v2493
  %v2497 = vclz %v2496
  %v2498 = vsub.s32 %v2497, 2
  %vm2499 = vcmp.gt.s32.totalorder 0, %v2498
  %v2500 = vsel %vm2499, 0, %v2498
  %v2501 = vsub.s32 32, %v2500
  %v2502 = vshll.u32 %v2493, %v2500
  %v2503 = vshrl.u32 %v2485, %v2501
  %v2504 = vor.u32 %v2502, %v2503
  %v2505 = vsub.s32 4294967266, %v2500
  %v2506 = vadd.s32 %v2505, 127
  %v2507 = vshll.u32 %v2506, 23
  %v2508 = vor.u32 4788187, %v2507
  %v2509 = vand.u32 2147483647, %v2508
  %v2511 = vcvt.s32.f32 %v2504
  %v2512 = vmul.f32 %v2511, %v2509
  %v2513 = vxor.u32 %v2512, 2147483648
  %v2514 = vsel %vm2431, %v2513, %v2512
  %v2515 = vsub.s32 4, %v2491
  %v2516 = vsel %vm2431, %v2515, %v2491
  %v2517 = vsel %vm2430, %v2319, %v2514
  %v2518 = vsel %vm2430, 0, %v2516
  %v2519 = vcosq.f32.pop %v2517
  %v2520 = vsinq.f32.pop %v2517
  %vm2521 = vweird.f32 %v2319
  %v2522 = vand.u32 %v2518, 3
  %vm2523 = vcmp.lt.s32.totalorder %v2522, 2
  %vm2524 = vcmp.eq.s32.totalorder %v2522, 0
  %v2525 = vxor.u32 %v2520, 2147483648
  %v2526 = vsel %vm2524, %v2519, %v2525
  %vm2527 = vcmp.eq.s32.totalorder %v2522, 2
  %v2528 = vxor.u32 %v2519, 2147483648
  %v2529 = vsel %vm2527, %v2528, %v2520
  %v2530 = vsel %vm2523, %v2526, %v2529
  %v2531 = vsel %vm2521, nan, %v2530
  %v2532 = vand.u32 2147483647, %v2320
  %vm2533 = vcmp.le.f32.partialorder %v2532, 0.7853982
  %vm2534 = vcmp.lt.s32.totalorder %v2320, 0
  %v2535 = vand.u32 %v2320, 2139095040
  %v2536 = vshrl.u32 %v2535, 23
  %v2537 = vsub.s32 %v2536, 127
  %v2538 = vand.u32 2147483647, %v2320
  %v2539 = vand.u32 %v2538, 8388607
  %v2540 = vor.u32 %v2539, 8388608
  %v2541 = vsub.s32 0, %v2540
  %v2542 = vadd.s32 %v2537, 1
  %vm2543 = vcmp.gt.s32.totalorder %v2542, 0
  %v2544 = vsel %vm2543, %v2542, 0
  %v2545 = vshrl.u32 %v2544, 5
  %v2546 = vand.u32 %v2544, 31
  %v2547 = vsub.s32 32, %v2546
  %v2548 = vshrl.u32 683565275, %v2547
  %v2549 = vshll.u32 683565275, %v2546
  %v2550 = vshrl.u32 2475754826, %v2547
  %v2551 = vor.u32 %v2549, %v2550
  %v2552 = vshll.u32 2475754826, %v2546
  %v2553 = vshrl.u32 2131351028, %v2547
  %v2554 = vor.u32 %v2552, %v2553
  %v2555 = vshll.u32 2131351028, %v2546
  %v2556 = vshrl.u32 2102212464, %v2547
  %v2557 = vor.u32 %v2555, %v2556
  %v2558 = vshll.u32 2102212464, %v2546
  %v2559 = vshrl.u32 920167782, %v2547
  %v2560 = vor.u32 %v2558, %v2559
  %v2561 = vshll.u32 920167782, %v2546
  %v2562 = vshrl.u32 1326507024, %v2547
  %v2563 = vor.u32 %v2561, %v2562
  %vm2564 = vcmp.lt.s32.totalorder %v2545, 1
  %vm2565 = vcmp.lt.s32.totalorder %v2545, 2
  %vm2566 = vcmp.lt.s32.totalorder %v2545, 3
  %vm2567 = vcmp.lt.s32.totalorder %v2545, 4
  %v2568 = vsel %vm2564, %v2548, %v2551
  %v2569 = vsel %vm2567, %v2557, 2102212464
  %v2570 = vsel %vm2566, %v2554, %v2569
  %v2571 = vsel %vm2565, %v2568, %v2570
  %v2572 = vsel %vm2564, %v2551, %v2554
  %v2573 = vsel %vm2567, %v2560, 920167782
  %v2574 = vsel %vm2566, %v2557, %v2573
  %v2575 = vsel %vm2565, %v2572, %v2574
  %v2576 = vsel %vm2564, %v2554, %v2557
  %v2577 = vsel %vm2567, %v2563, 1326507024
  %v2578 = vsel %vm2566, %v2560, %v2577
  %v2579 = vsel %vm2565, %v2576, %v2578
  %v2580 = vshll.u32 %v2540, 8
  %v2581 = vmul.u32.u64.compose %v2580, %v2579
  %v2582 = vextract.low.u32 %v2581
  %v2583 = vextract.high.u32 %v2581
  %v2584 = vmul.u32.u64.compose %v2580, %v2575
  %v2585 = vextract.low.u32 %v2584
  %v2586 = vextract.high.u32 %v2584
  %v2587 = vmul.u32 %v2580, %v2571
  %v2588 = vadd.s32 %v2583, %v2585
  %vm2589 = vc.u32 %v2583, %v2585
  %v2590 = vadd.s32 %v2586, 1
  %v2591 = vsel %vm2589, %v2590, %v2586
  %v2592 = vadd.s32 %v2587, %v2591
  %v2593 = vadd.s32 %v2592, 536870912
  %v2594 = vshrl.u32 %v2593, 30
  %v2595 = vshll.u32 %v2594, 30
  %v2596 = vsub.s32 %v2592, %v2595
  %vm2597 = vcmp.lt.s32.totalorder %v2596, 0
  %v2598 = vsub.s32 0, %v2596
  %v2599 = vsel %vm2597, %v2598, %v2596
  %v2600 = vclz %v2599
  %v2601 = vsub.s32 %v2600, 2
  %vm2602 = vcmp.gt.s32.totalorder 0, %v2601
  %v2603 = vsel %vm2602, 0, %v2601
  %v2604 = vsub.s32 32, %v2603
  %v2605 = vshll.u32 %v2596, %v2603
  %v2606 = vshrl.u32 %v2588, %v2604
  %v2607 = vor.u32 %v2605, %v2606
  %v2608 = vsub.s32 4294967266, %v2603
  %v2609 = vadd.s32 %v2608, 127
  %v2610 = vshll.u32 %v2609, 23
  %v2611 = vor.u32 4788187, %v2610
  %v2612 = vand.u32 2147483647, %v2611
  %v2614 = vcvt.s32.f32 %v2607
  %v2615 = vmul.f32 %v2614, %v2612
  %v2616 = vxor.u32 %v2615, 2147483648
  %v2617 = vsel %vm2534, %v2616, %v2615
  %v2618 = vsub.s32 4, %v2594
  %v2619 = vsel %vm2534, %v2618, %v2594
  %v2620 = vsel %vm2533, %v2320, %v2617
  %v2621 = vsel %vm2533, 0, %v2619
  %v2622 = vcosq.f32.pop %v2620
  %v2623 = vsinq.f32.pop %v2620
  %vm2624 = vweird.f32 %v2320
  %v2625 = vand.u32 %v2621, 3
  %vm2626 = vcmp.lt.s32.totalorder %v2625, 2
  %vm2627 = vcmp.eq.s32.totalorder %v2625, 0
  %v2628 = vxor.u32 %v2623, 2147483648
  %v2629 = vsel %vm2627, %v2622, %v2628
  %vm2630 = vcmp.eq.s32.totalorder %v2625, 2
  %v2631 = vxor.u32 %v2622, 2147483648
  %v2632 = vsel %vm2630, %v2631, %v2623
  %v2633 = vsel %vm2626, %v2629, %v2632
  %v2634 = vsel %vm2624, nan, %v2633
  %v2635 = vand.u32 2147483647, %v2321
  %vm2636 = vcmp.le.f32.partialorder %v2635, 0.7853982
  %vm2637 = vcmp.lt.s32.totalorder %v2321, 0
  %v2638 = vand.u32 %v2321, 2139095040
  %v2639 = vshrl.u32 %v2638, 23
  %v2640 = vsub.s32 %v2639, 127
  %v2641 = vand.u32 2147483647, %v2321
  %v2642 = vand.u32 %v2641, 8388607
  %v2643 = vor.u32 %v2642, 8388608
  %v2644 = vsub.s32 0, %v2643
  %v2645 = vadd.s32 %v2640, 1
  %vm2646 = vcmp.gt.s32.totalorder %v2645, 0
  %v2647 = vsel %vm2646, %v2645, 0
  %v2648 = vshrl.u32 %v2647, 5
  %v2649 = vand.u32 %v2647, 31
  %v2650 = vsub.s32 32, %v2649
  %v2651 = vshrl.u32 683565275, %v2650
  %v2652 = vshll.u32 683565275, %v2649
  %v2653 = vshrl.u32 2475754826, %v2650
  %v2654 = vor.u32 %v2652, %v2653
  %v2655 = vshll.u32 2475754826, %v2649
  %v2656 = vshrl.u32 2131351028, %v2650
  %v2657 = vor.u32 %v2655, %v2656
  %v2658 = vshll.u32 2131351028, %v2649
  %v2659 = vshrl.u32 2102212464, %v2650
  %v2660 = vor.u32 %v2658, %v2659
  %v2661 = vshll.u32 2102212464, %v2649
  %v2662 = vshrl.u32 920167782, %v2650
  %v2663 = vor.u32 %v2661, %v2662
  %v2664 = vshll.u32 920167782, %v2649
  %v2665 = vshrl.u32 1326507024, %v2650
  %v2666 = vor.u32 %v2664, %v2665
  %vm2667 = vcmp.lt.s32.totalorder %v2648, 1
  %vm2668 = vcmp.lt.s32.totalorder %v2648, 2
  %vm2669 = vcmp.lt.s32.totalorder %v2648, 3
  %vm2670 = vcmp.lt.s32.totalorder %v2648, 4
  %v2671 = vsel %vm2667, %v2651, %v2654
  %v2672 = vsel %vm2670, %v2660, 2102212464
  %v2673 = vsel %vm2669, %v2657, %v2672
  %v2674 = vsel %vm2668, %v2671, %v2673
  %v2675 = vsel %vm2667, %v2654, %v2657
  %v2676 = vsel %vm2670, %v2663, 920167782
  %v2677 = vsel %vm2669, %v2660, %v2676
  %v2678 = vsel %vm2668, %v2675, %v2677
  %v2679 = vsel %vm2667, %v2657, %v2660
  %v2680 = vsel %vm2670, %v2666, 1326507024
  %v2681 = vsel %vm2669, %v2663, %v2680
  %v2682 = vsel %vm2668, %v2679, %v2681
  %v2683 = vshll.u32 %v2643, 8
  %v2684 = vmul.u32.u64.compose %v2683, %v2682
  %v2685 = vextract.low.u32 %v2684
  %v2686 = vextract.high.u32 %v2684
  %v2687 = vmul.u32.u64.compose %v2683, %v2678
  %v2688 = vextract.low.u32 %v2687
  %v2689 = vextract.high.u32 %v2687
  %v2690 = vmul.u32 %v2683, %v2674
  %v2691 = vadd.s32 %v2686, %v2688
  %vm2692 = vc.u32 %v2686, %v2688
  %v2693 = vadd.s32 %v2689, 1
  %v2694 = vsel %vm2692, %v2693, %v2689
  %v2695 = vadd.s32 %v2690, %v2694
  %v2696 = vadd.s32 %v2695, 536870912
  %v2697 = vshrl.u32 %v2696, 30
  %v2698 = vshll.u32 %v2697, 30
  %v2699 = vsub.s32 %v2695, %v2698
  %vm2700 = vcmp.lt.s32.totalorder %v2699, 0
  %v2701 = vsub.s32 0, %v2699
  %v2702 = vsel %vm2700, %v2701, %v2699
  %v2703 = vclz %v2702
  %v2704 = vsub.s32 %v2703, 2
  %vm2705 = vcmp.gt.s32.totalorder 0, %v2704
  %v2706 = vsel %vm2705, 0, %v2704
  %v2707 = vsub.s32 32, %v2706
  %v2708 = vshll.u32 %v2699, %v2706
  %v2709 = vshrl.u32 %v2691, %v2707
  %v2710 = vor.u32 %v2708, %v2709
  %v2711 = vsub.s32 4294967266, %v2706
  %v2712 = vadd.s32 %v2711, 127
  %v2713 = vshll.u32 %v2712, 23
  %v2714 = vor.u32 4788187, %v2713
  %v2715 = vand.u32 2147483647, %v2714
  %v2717 = vcvt.s32.f32 %v2710
  %v2718 = vmul.f32 %v2717, %v2715
  %v2719 = vxor.u32 %v2718, 2147483648
  %v2720 = vsel %vm2637, %v2719, %v2718
  %v2721 = vsub.s32 4, %v2697
  %v2722 = vsel %vm2637, %v2721, %v2697
  %v2723 = vsel %vm2636, %v2321, %v2720
  %v2724 = vsel %vm2636, 0, %v2722
  %v2725 = vcosq.f32.pop %v2723
  %v2726 = vsinq.f32.pop %v2723
  %vm2727 = vweird.f32 %v2321
  %v2728 = vand.u32 %v2724, 3
  %vm2729 = vcmp.lt.s32.totalorder %v2728, 2
  %vm2730 = vcmp.eq.s32.totalorder %v2728, 0
  %v2731 = vxor.u32 %v2726, 2147483648
  %v2732 = vsel %vm2730, %v2725, %v2731
  %vm2733 = vcmp.eq.s32.totalorder %v2728, 2
  %v2734 = vxor.u32 %v2725, 2147483648
  %v2735 = vsel %vm2733, %v2734, %v2726
  %v2736 = vsel %vm2729, %v2732, %v2735
  %v2737 = vsel %vm2727, nan, %v2736
  %v2738 = vand.u32 2147483647, %v2322
  %vm2739 = vcmp.le.f32.partialorder %v2738, 0.7853982
  %vm2740 = vcmp.lt.s32.totalorder %v2322, 0
  %v2741 = vand.u32 %v2322, 2139095040
  %v2742 = vshrl.u32 %v2741, 23
  %v2743 = vsub.s32 %v2742, 127
  %v2744 = vand.u32 2147483647, %v2322
  %v2745 = vand.u32 %v2744, 8388607
  %v2746 = vor.u32 %v2745, 8388608
  %v2747 = vsub.s32 0, %v2746
  %v2748 = vadd.s32 %v2743, 1
  %vm2749 = vcmp.gt.s32.totalorder %v2748, 0
  %v2750 = vsel %vm2749, %v2748, 0
  %v2751 = vshrl.u32 %v2750, 5
  %v2752 = vand.u32 %v2750, 31
  %v2753 = vsub.s32 32, %v2752
  %v2754 = vshrl.u32 683565275, %v2753
  %v2755 = vshll.u32 683565275, %v2752
  %v2756 = vshrl.u32 2475754826, %v2753
  %v2757 = vor.u32 %v2755, %v2756
  %v2758 = vshll.u32 2475754826, %v2752
  %v2759 = vshrl.u32 2131351028, %v2753
  %v2760 = vor.u32 %v2758, %v2759
  %v2761 = vshll.u32 2131351028, %v2752
  %v2762 = vshrl.u32 2102212464, %v2753
  %v2763 = vor.u32 %v2761, %v2762
  %v2764 = vshll.u32 2102212464, %v2752
  %v2765 = vshrl.u32 920167782, %v2753
  %v2766 = vor.u32 %v2764, %v2765
  %v2767 = vshll.u32 920167782, %v2752
  %v2768 = vshrl.u32 1326507024, %v2753
  %v2769 = vor.u32 %v2767, %v2768
  %vm2770 = vcmp.lt.s32.totalorder %v2751, 1
  %vm2771 = vcmp.lt.s32.totalorder %v2751, 2
  %vm2772 = vcmp.lt.s32.totalorder %v2751, 3
  %vm2773 = vcmp.lt.s32.totalorder %v2751, 4
  %v2774 = vsel %vm2770, %v2754, %v2757
  %v2775 = vsel %vm2773, %v2763, 2102212464
  %v2776 = vsel %vm2772, %v2760, %v2775
  %v2777 = vsel %vm2771, %v2774, %v2776
  %v2778 = vsel %vm2770, %v2757, %v2760
  %v2779 = vsel %vm2773, %v2766, 920167782
  %v2780 = vsel %vm2772, %v2763, %v2779
  %v2781 = vsel %vm2771, %v2778, %v2780
  %v2782 = vsel %vm2770, %v2760, %v2763
  %v2783 = vsel %vm2773, %v2769, 1326507024
  %v2784 = vsel %vm2772, %v2766, %v2783
  %v2785 = vsel %vm2771, %v2782, %v2784
  %v2786 = vshll.u32 %v2746, 8
  %v2787 = vmul.u32.u64.compose %v2786, %v2785
  %v2788 = vextract.low.u32 %v2787
  %v2789 = vextract.high.u32 %v2787
  %v2790 = vmul.u32.u64.compose %v2786, %v2781
  %v2791 = vextract.low.u32 %v2790
  %v2792 = vextract.high.u32 %v2790
  %v2793 = vmul.u32 %v2786, %v2777
  %v2794 = vadd.s32 %v2789, %v2791
  %vm2795 = vc.u32 %v2789, %v2791
  %v2796 = vadd.s32 %v2792, 1
  %v2797 = vsel %vm2795, %v2796, %v2792
  %v2798 = vadd.s32 %v2793, %v2797
  %v2799 = vadd.s32 %v2798, 536870912
  %v2800 = vshrl.u32 %v2799, 30
  %v2801 = vshll.u32 %v2800, 30
  %v2802 = vsub.s32 %v2798, %v2801
  %vm2803 = vcmp.lt.s32.totalorder %v2802, 0
  %v2804 = vsub.s32 0, %v2802
  %v2805 = vsel %vm2803, %v2804, %v2802
  %v2806 = vclz %v2805
  %v2807 = vsub.s32 %v2806, 2
  %vm2808 = vcmp.gt.s32.totalorder 0, %v2807
  %v2809 = vsel %vm2808, 0, %v2807
  %v2810 = vsub.s32 32, %v2809
  %v2811 = vshll.u32 %v2802, %v2809
  %v2812 = vshrl.u32 %v2794, %v2810
  %v2813 = vor.u32 %v2811, %v2812
  %v2814 = vsub.s32 4294967266, %v2809
  %v2815 = vadd.s32 %v2814, 127
  %v2816 = vshll.u32 %v2815, 23
  %v2817 = vor.u32 4788187, %v2816
  %v2818 = vand.u32 2147483647, %v2817
  %v2820 = vcvt.s32.f32 %v2813
  %v2821 = vmul.f32 %v2820, %v2818
  %v2822 = vxor.u32 %v2821, 2147483648
  %v2823 = vsel %vm2740, %v2822, %v2821
  %v2824 = vsub.s32 4, %v2800
  %v2825 = vsel %vm2740, %v2824, %v2800
  %v2826 = vsel %vm2739, %v2322, %v2823
  %v2827 = vsel %vm2739, 0, %v2825
  %v2828 = vcosq.f32.pop %v2826
  %v2829 = vsinq.f32.pop %v2826
  %vm2830 = vweird.f32 %v2322
  %v2831 = vand.u32 %v2827, 3
  %vm2832 = vcmp.lt.s32.totalorder %v2831, 2
  %vm2833 = vcmp.eq.s32.totalorder %v2831, 0
  %v2834 = vxor.u32 %v2829, 2147483648
  %v2835 = vsel %vm2833, %v2828, %v2834
  %vm2836 = vcmp.eq.s32.totalorder %v2831, 2
  %v2837 = vxor.u32 %v2828, 2147483648
  %v2838 = vsel %vm2836, %v2837, %v2829
  %v2839 = vsel %vm2832, %v2835, %v2838
  %v2840 = vsel %vm2830, nan, %v2839
  %v2841 = vand.u32 2147483647, %v2323
  %vm2842 = vcmp.le.f32.partialorder %v2841, 0.7853982
  %vm2843 = vcmp.lt.s32.totalorder %v2323, 0
  %v2844 = vand.u32 %v2323, 2139095040
  %v2845 = vshrl.u32 %v2844, 23
  %v2846 = vsub.s32 %v2845, 127
  %v2847 = vand.u32 2147483647, %v2323
  %v2848 = vand.u32 %v2847, 8388607
  %v2849 = vor.u32 %v2848, 8388608
  %v2850 = vsub.s32 0, %v2849
  %v2851 = vadd.s32 %v2846, 1
  %vm2852 = vcmp.gt.s32.totalorder %v2851, 0
  %v2853 = vsel %vm2852, %v2851, 0
  %v2854 = vshrl.u32 %v2853, 5
  %v2855 = vand.u32 %v2853, 31
  %v2856 = vsub.s32 32, %v2855
  %v2857 = vshrl.u32 683565275, %v2856
  %v2858 = vshll.u32 683565275, %v2855
  %v2859 = vshrl.u32 2475754826, %v2856
  %v2860 = vor.u32 %v2858, %v2859
  %v2861 = vshll.u32 2475754826, %v2855
  %v2862 = vshrl.u32 2131351028, %v2856
  %v2863 = vor.u32 %v2861, %v2862
  %v2864 = vshll.u32 2131351028, %v2855
  %v2865 = vshrl.u32 2102212464, %v2856
  %v2866 = vor.u32 %v2864, %v2865
  %v2867 = vshll.u32 2102212464, %v2855
  %v2868 = vshrl.u32 920167782, %v2856
  %v2869 = vor.u32 %v2867, %v2868
  %v2870 = vshll.u32 920167782, %v2855
  %v2871 = vshrl.u32 1326507024, %v2856
  %v2872 = vor.u32 %v2870, %v2871
  %vm2873 = vcmp.lt.s32.totalorder %v2854, 1
  %vm2874 = vcmp.lt.s32.totalorder %v2854, 2
  %vm2875 = vcmp.lt.s32.totalorder %v2854, 3
  %vm2876 = vcmp.lt.s32.totalorder %v2854, 4
  %v2877 = vsel %vm2873, %v2857, %v2860
  %v2878 = vsel %vm2876, %v2866, 2102212464
  %v2879 = vsel %vm2875, %v2863, %v2878
  %v2880 = vsel %vm2874, %v2877, %v2879
  %v2881 = vsel %vm2873, %v2860, %v2863
  %v2882 = vsel %vm2876, %v2869, 920167782
  %v2883 = vsel %vm2875, %v2866, %v2882
  %v2884 = vsel %vm2874, %v2881, %v2883
  %v2885 = vsel %vm2873, %v2863, %v2866
  %v2886 = vsel %vm2876, %v2872, 1326507024
  %v2887 = vsel %vm2875, %v2869, %v2886
  %v2888 = vsel %vm2874, %v2885, %v2887
  %v2889 = vshll.u32 %v2849, 8
  %v2890 = vmul.u32.u64.compose %v2889, %v2888
  %v2891 = vextract.low.u32 %v2890
  %v2892 = vextract.high.u32 %v2890
  %v2893 = vmul.u32.u64.compose %v2889, %v2884
  %v2894 = vextract.low.u32 %v2893
  %v2895 = vextract.high.u32 %v2893
  %v2896 = vmul.u32 %v2889, %v2880
  %v2897 = vadd.s32 %v2892, %v2894
  %vm2898 = vc.u32 %v2892, %v2894
  %v2899 = vadd.s32 %v2895, 1
  %v2900 = vsel %vm2898, %v2899, %v2895
  %v2901 = vadd.s32 %v2896, %v2900
  %v2902 = vadd.s32 %v2901, 536870912
  %v2903 = vshrl.u32 %v2902, 30
  %v2904 = vshll.u32 %v2903, 30
  %v2905 = vsub.s32 %v2901, %v2904
  %vm2906 = vcmp.lt.s32.totalorder %v2905, 0
  %v2907 = vsub.s32 0, %v2905
  %v2908 = vsel %vm2906, %v2907, %v2905
  %v2909 = vclz %v2908
  %v2910 = vsub.s32 %v2909, 2
  %vm2911 = vcmp.gt.s32.totalorder 0, %v2910
  %v2912 = vsel %vm2911, 0, %v2910
  %v2913 = vsub.s32 32, %v2912
  %v2914 = vshll.u32 %v2905, %v2912
  %v2915 = vshrl.u32 %v2897, %v2913
  %v2916 = vor.u32 %v2914, %v2915
  %v2917 = vsub.s32 4294967266, %v2912
  %v2918 = vadd.s32 %v2917, 127
  %v2919 = vshll.u32 %v2918, 23
  %v2920 = vor.u32 4788187, %v2919
  %v2921 = vand.u32 2147483647, %v2920
  %v2923 = vcvt.s32.f32 %v2916
  %v2924 = vmul.f32 %v2923, %v2921
  %v2925 = vxor.u32 %v2924, 2147483648
  %v2926 = vsel %vm2843, %v2925, %v2924
  %v2927 = vsub.s32 4, %v2903
  %v2928 = vsel %vm2843, %v2927, %v2903
  %v2929 = vsel %vm2842, %v2323, %v2926
  %v2930 = vsel %vm2842, 0, %v2928
  %v2931 = vcosq.f32.pop %v2929
  %v2932 = vsinq.f32.pop %v2929
  %vm2933 = vweird.f32 %v2323
  %v2934 = vand.u32 %v2930, 3
  %vm2935 = vcmp.lt.s32.totalorder %v2934, 2
  %vm2936 = vcmp.eq.s32.totalorder %v2934, 0
  %v2937 = vxor.u32 %v2932, 2147483648
  %v2938 = vsel %vm2936, %v2931, %v2937
  %vm2939 = vcmp.eq.s32.totalorder %v2934, 2
  %v2940 = vxor.u32 %v2931, 2147483648
  %v2941 = vsel %vm2939, %v2940, %v2932
  %v2942 = vsel %vm2935, %v2938, %v2941
  %v2943 = vsel %vm2933, nan, %v2942
  %v2944 = vand.u32 2147483647, %v2324
  %vm2945 = vcmp.le.f32.partialorder %v2944, 0.7853982
  %vm2946 = vcmp.lt.s32.totalorder %v2324, 0
  %v2947 = vand.u32 %v2324, 2139095040
  %v2948 = vshrl.u32 %v2947, 23
  %v2949 = vsub.s32 %v2948, 127
  %v2950 = vand.u32 2147483647, %v2324
  %v2951 = vand.u32 %v2950, 8388607
  %v2952 = vor.u32 %v2951, 8388608
  %v2953 = vsub.s32 0, %v2952
  %v2954 = vadd.s32 %v2949, 1
  %vm2955 = vcmp.gt.s32.totalorder %v2954, 0
  %v2956 = vsel %vm2955, %v2954, 0
  %v2957 = vshrl.u32 %v2956, 5
  %v2958 = vand.u32 %v2956, 31
  %v2959 = vsub.s32 32, %v2958
  %v2960 = vshrl.u32 683565275, %v2959
  %v2961 = vshll.u32 683565275, %v2958
  %v2962 = vshrl.u32 2475754826, %v2959
  %v2963 = vor.u32 %v2961, %v2962
  %v2964 = vshll.u32 2475754826, %v2958
  %v2965 = vshrl.u32 2131351028, %v2959
  %v2966 = vor.u32 %v2964, %v2965
  %v2967 = vshll.u32 2131351028, %v2958
  %v2968 = vshrl.u32 2102212464, %v2959
  %v2969 = vor.u32 %v2967, %v2968
  %v2970 = vshll.u32 2102212464, %v2958
  %v2971 = vshrl.u32 920167782, %v2959
  %v2972 = vor.u32 %v2970, %v2971
  %v2973 = vshll.u32 920167782, %v2958
  %v2974 = vshrl.u32 1326507024, %v2959
  %v2975 = vor.u32 %v2973, %v2974
  %vm2976 = vcmp.lt.s32.totalorder %v2957, 1
  %vm2977 = vcmp.lt.s32.totalorder %v2957, 2
  %vm2978 = vcmp.lt.s32.totalorder %v2957, 3
  %vm2979 = vcmp.lt.s32.totalorder %v2957, 4
  %v2980 = vsel %vm2976, %v2960, %v2963
  %v2981 = vsel %vm2979, %v2969, 2102212464
  %v2982 = vsel %vm2978, %v2966, %v2981
  %v2983 = vsel %vm2977, %v2980, %v2982
  %v2984 = vsel %vm2976, %v2963, %v2966
  %v2985 = vsel %vm2979, %v2972, 920167782
  %v2986 = vsel %vm2978, %v2969, %v2985
  %v2987 = vsel %vm2977, %v2984, %v2986
  %v2988 = vsel %vm2976, %v2966, %v2969
  %v2989 = vsel %vm2979, %v2975, 1326507024
  %v2990 = vsel %vm2978, %v2972, %v2989
  %v2991 = vsel %vm2977, %v2988, %v2990
  %v2992 = vshll.u32 %v2952, 8
  %v2993 = vmul.u32.u64.compose %v2992, %v2991
  %v2994 = vextract.low.u32 %v2993
  %v2995 = vextract.high.u32 %v2993
  %v2996 = vmul.u32.u64.compose %v2992, %v2987
  %v2997 = vextract.low.u32 %v2996
  %v2998 = vextract.high.u32 %v2996
  %v2999 = vmul.u32 %v2992, %v2983
  %v3000 = vadd.s32 %v2995, %v2997
  %vm3001 = vc.u32 %v2995, %v2997
  %v3002 = vadd.s32 %v2998, 1
  %v3003 = vsel %vm3001, %v3002, %v2998
  %v3004 = vadd.s32 %v2999, %v3003
  %v3005 = vadd.s32 %v3004, 536870912
  %v3006 = vshrl.u32 %v3005, 30
  %v3007 = vshll.u32 %v3006, 30
  %v3008 = vsub.s32 %v3004, %v3007
  %vm3009 = vcmp.lt.s32.totalorder %v3008, 0
  %v3010 = vsub.s32 0, %v3008
  %v3011 = vsel %vm3009, %v3010, %v3008
  %v3012 = vclz %v3011
  %v3013 = vsub.s32 %v3012, 2
  %vm3014 = vcmp.gt.s32.totalorder 0, %v3013
  %v3015 = vsel %vm3014, 0, %v3013
  %v3016 = vsub.s32 32, %v3015
  %v3017 = vshll.u32 %v3008, %v3015
  %v3018 = vshrl.u32 %v3000, %v3016
  %v3019 = vor.u32 %v3017, %v3018
  %v3020 = vsub.s32 4294967266, %v3015
  %v3021 = vadd.s32 %v3020, 127
  %v3022 = vshll.u32 %v3021, 23
  %v3023 = vor.u32 4788187, %v3022
  %v3024 = vand.u32 2147483647, %v3023
  %v3026 = vcvt.s32.f32 %v3019
  %v3027 = vmul.f32 %v3026, %v3024
  %v3028 = vxor.u32 %v3027, 2147483648
  %v3029 = vsel %vm2946, %v3028, %v3027
  %v3030 = vsub.s32 4, %v3006
  %v3031 = vsel %vm2946, %v3030, %v3006
  %v3032 = vsel %vm2945, %v2324, %v3029
  %v3033 = vsel %vm2945, 0, %v3031
  %v3034 = vcosq.f32.pop %v3032
  %v3035 = vsinq.f32.pop %v3032
  %vm3036 = vweird.f32 %v2324
  %v3037 = vand.u32 %v3033, 3
  %vm3038 = vcmp.lt.s32.totalorder %v3037, 2
  %vm3039 = vcmp.eq.s32.totalorder %v3037, 0
  %v3040 = vxor.u32 %v3035, 2147483648
  %v3041 = vsel %vm3039, %v3034, %v3040
  %vm3042 = vcmp.eq.s32.totalorder %v3037, 2
  %v3043 = vxor.u32 %v3034, 2147483648
  %v3044 = vsel %vm3042, %v3043, %v3035
  %v3045 = vsel %vm3038, %v3041, %v3044
  %v3046 = vsel %vm3036, nan, %v3045
  %v3047 = vand.u32 2147483647, %v2325
  %vm3048 = vcmp.le.f32.partialorder %v3047, 0.7853982
  %vm3049 = vcmp.lt.s32.totalorder %v2325, 0
  %v3050 = vand.u32 %v2325, 2139095040
  %v3051 = vshrl.u32 %v3050, 23
  %v3052 = vsub.s32 %v3051, 127
  %v3053 = vand.u32 2147483647, %v2325
  %v3054 = vand.u32 %v3053, 8388607
  %v3055 = vor.u32 %v3054, 8388608
  %v3056 = vsub.s32 0, %v3055
  %v3057 = vadd.s32 %v3052, 1
  %vm3058 = vcmp.gt.s32.totalorder %v3057, 0
  %v3059 = vsel %vm3058, %v3057, 0
  %v3060 = vshrl.u32 %v3059, 5
  %v3061 = vand.u32 %v3059, 31
  %v3062 = vsub.s32 32, %v3061
  %v3063 = vshrl.u32 683565275, %v3062
  %v3064 = vshll.u32 683565275, %v3061
  %v3065 = vshrl.u32 2475754826, %v3062
  %v3066 = vor.u32 %v3064, %v3065
  %v3067 = vshll.u32 2475754826, %v3061
  %v3068 = vshrl.u32 2131351028, %v3062
  %v3069 = vor.u32 %v3067, %v3068
  %v3070 = vshll.u32 2131351028, %v3061
  %v3071 = vshrl.u32 2102212464, %v3062
  %v3072 = vor.u32 %v3070, %v3071
  %v3073 = vshll.u32 2102212464, %v3061
  %v3074 = vshrl.u32 920167782, %v3062
  %v3075 = vor.u32 %v3073, %v3074
  %v3076 = vshll.u32 920167782, %v3061
  %v3077 = vshrl.u32 1326507024, %v3062
  %v3078 = vor.u32 %v3076, %v3077
  %vm3079 = vcmp.lt.s32.totalorder %v3060, 1
  %vm3080 = vcmp.lt.s32.totalorder %v3060, 2
  %vm3081 = vcmp.lt.s32.totalorder %v3060, 3
  %vm3082 = vcmp.lt.s32.totalorder %v3060, 4
  %v3083 = vsel %vm3079, %v3063, %v3066
  %v3084 = vsel %vm3082, %v3072, 2102212464
  %v3085 = vsel %vm3081, %v3069, %v3084
  %v3086 = vsel %vm3080, %v3083, %v3085
  %v3087 = vsel %vm3079, %v3066, %v3069
  %v3088 = vsel %vm3082, %v3075, 920167782
  %v3089 = vsel %vm3081, %v3072, %v3088
  %v3090 = vsel %vm3080, %v3087, %v3089
  %v3091 = vsel %vm3079, %v3069, %v3072
  %v3092 = vsel %vm3082, %v3078, 1326507024
  %v3093 = vsel %vm3081, %v3075, %v3092
  %v3094 = vsel %vm3080, %v3091, %v3093
  %v3095 = vshll.u32 %v3055, 8
  %v3096 = vmul.u32.u64.compose %v3095, %v3094
  %v3097 = vextract.low.u32 %v3096
  %v3098 = vextract.high.u32 %v3096
  %v3099 = vmul.u32.u64.compose %v3095, %v3090
  %v3100 = vextract.low.u32 %v3099
  %v3101 = vextract.high.u32 %v3099
  %v3102 = vmul.u32 %v3095, %v3086
  %v3103 = vadd.s32 %v3098, %v3100
  %vm3104 = vc.u32 %v3098, %v3100
  %v3105 = vadd.s32 %v3101, 1
  %v3106 = vsel %vm3104, %v3105, %v3101
  %v3107 = vadd.s32 %v3102, %v3106
  %v3108 = vadd.s32 %v3107, 536870912
  %v3109 = vshrl.u32 %v3108, 30
  %v3110 = vshll.u32 %v3109, 30
  %v3111 = vsub.s32 %v3107, %v3110
  %vm3112 = vcmp.lt.s32.totalorder %v3111, 0
  %v3113 = vsub.s32 0, %v3111
  %v3114 = vsel %vm3112, %v3113, %v3111
  %v3115 = vclz %v3114
  %v3116 = vsub.s32 %v3115, 2
  %vm3117 = vcmp.gt.s32.totalorder 0, %v3116
  %v3118 = vsel %vm3117, 0, %v3116
  %v3119 = vsub.s32 32, %v3118
  %v3120 = vshll.u32 %v3111, %v3118
  %v3121 = vshrl.u32 %v3103, %v3119
  %v3122 = vor.u32 %v3120, %v3121
  %v3123 = vsub.s32 4294967266, %v3118
  %v3124 = vadd.s32 %v3123, 127
  %v3125 = vshll.u32 %v3124, 23
  %v3126 = vor.u32 4788187, %v3125
  %v3127 = vand.u32 2147483647, %v3126
  %v3129 = vcvt.s32.f32 %v3122
  %v3130 = vmul.f32 %v3129, %v3127
  %v3131 = vxor.u32 %v3130, 2147483648
  %v3132 = vsel %vm3049, %v3131, %v3130
  %v3133 = vsub.s32 4, %v3109
  %v3134 = vsel %vm3049, %v3133, %v3109
  %v3135 = vsel %vm3048, %v2325, %v3132
  %v3136 = vsel %vm3048, 0, %v3134
  %v3137 = vcosq.f32.pop %v3135
  %v3138 = vsinq.f32.pop %v3135
  %vm3139 = vweird.f32 %v2325
  %v3140 = vand.u32 %v3136, 3
  %vm3141 = vcmp.lt.s32.totalorder %v3140, 2
  %vm3142 = vcmp.eq.s32.totalorder %v3140, 0
  %v3143 = vxor.u32 %v3138, 2147483648
  %v3144 = vsel %vm3142, %v3137, %v3143
  %vm3145 = vcmp.eq.s32.totalorder %v3140, 2
  %v3146 = vxor.u32 %v3137, 2147483648
  %v3147 = vsel %vm3145, %v3146, %v3138
  %v3148 = vsel %vm3141, %v3144, %v3147
  %v3149 = vsel %vm3139, nan, %v3148
  %v3158 = vcombine.low %v2428, %v2531
  %v3159 = vcombine.low %v2634, %v2737
  %v3160 = vcombine.low %v2840, %v2943
  %v3161 = vcombine.low %v3046, %v3149
  %v3163 = vunpack.c.l.s4 1966171168
  %v3164 = vunpack.c.0.s8 %v3163
  %v3165 = vlaneseq
  %v3166 = vshrl.u32 %v3165, 7
  %v3167 = vsub.s32 %v3164, %v3166
  %v3168 = vrot.slane %v3158, %v3167
  %v3170 = vunpack.c.l.s4 1966171168
  %v3171 = vunpack.c.0.s8 %v3170
  %v3172 = vlaneseq
  %v3173 = vshrl.u32 %v3172, 7
  %v3174 = vsub.s32 %v3171, %v3173
  %v3175 = vrot.slane %v3159, %v3174
  %v3177 = vunpack.c.l.s4 1966171168
  %v3178 = vunpack.c.0.s8 %v3177
  %v3179 = vlaneseq
  %v3180 = vshrl.u32 %v3179, 7
  %v3181 = vsub.s32 %v3178, %v3180
  %v3182 = vrot.slane %v3160, %v3181
  %v3184 = vunpack.c.l.s4 1966171168
  %v3185 = vunpack.c.0.s8 %v3184
  %v3186 = vlaneseq
  %v3187 = vshrl.u32 %v3186, 7
  %v3188 = vsub.s32 %v3185, %v3187
  %v3189 = vrot.slane %v3161, %v3188
  %v3190 = vcombine.low %v3168, %v3175
  %v3191 = vcombine.low %v3182, %v3189
  %v3193 = vunpack.c.l.s4 1966171168
  %v3194 = vunpack.c.0.s8 %v3193
  %v3195 = vlaneseq
  %v3196 = vshrl.u32 %v3195, 7
  %v3197 = vsub.s32 %v3194, %v3196
  %v3198 = vrot.slane %v3190, %v3197
  %v3200 = vunpack.c.l.s4 1966171168
  %v3201 = vunpack.c.0.s8 %v3200
  %v3202 = vlaneseq
  %v3203 = vshrl.u32 %v3202, 7
  %v3204 = vsub.s32 %v3201, %v3203
  %v3205 = vrot.slane %v3191, %v3204
  %v3206 = vcombine.low %v3198, %v3205
  %3208 = vst [vmem:[%s4] sm:$0xff] %v3206
  // Predicated region
  $region18: #{time_embedding.1} parent=0 // pred_check
    _
  $region19: #{time_embedding.1} parent=0 // pred_check_branch
    %3210 = sbr.rel (0) target = $region21
  $region20: #{time_embedding.1} parent=0 // pred_region
    _
  $region21: #{time_embedding.1} parent=0 // pred_fallthru
    _
  // Predicated region
  $region22: #{time_embedding.1} parent=0 // pred_check
    _
  $region23: #{time_embedding.1} parent=0 // pred_check_branch
    %3212 = sbr.rel (0) target = $region25
  $region24: #{time_embedding.1} parent=0 // pred_region
    _
  $region25: #{time_embedding.1} parent=0 // pred_fallthru
    _

</llo_original>
